<compile_context>
chip_gen: v5e
topology: v5e:2x2
jax: 0.10.0
libtpu: 0.0.40
codegen_flags: <defaults>
</compile_context>

<pallas_src>
import functools
import math

import jax
import jax.numpy as jnp
from jax.experimental import pallas as pl
from jax.experimental.pallas import tpu as pltpu


# ---------------------------------------------------------------------------
# elementwise loss (torch defaults; caller applies the 'mean' reduction)
# ---------------------------------------------------------------------------
def _elementwise_loss(diff, loss_type):
    if loss_type == 'MSE':
        return diff * diff
    if loss_type == 'L1':
        return jnp.abs(diff)
    if loss_type in ('SmoothL1', 'Huber'):   # beta = delta = 1.0 -> identical
        a = jnp.abs(diff)
        return jnp.where(a < 1.0, 0.5 * diff * diff, a - 0.5)
    raise ValueError(f'unsupported loss_type: {loss_type}')


# ---------------------------------------------------------------------------
# fused kernel: streaming reduction over (batch-tile, stage) grid + in-kernel
# softmax / reverse / weighted-sum epilogue -> one scalar out.
# ---------------------------------------------------------------------------
def _skd_loss_kernel(t_ref, s_ref, tfc_ref, sfc_ref, out_ref,
                     base_t_acc, base_fc_acc, emb_t_acc, emb_fc_acc,
                     stg_t_acc, stg_fc_acc, samp_t_acc, samp_fc_acc,
                     stage_t_buf, stage_fc_buf,
                     *, S, B, loss_type, reverse):
    bi = pl.program_id(0)            # batch-tile index (outer)
    si = pl.program_id(1)            # stage index (inner / reduction axis)
    nb = pl.num_programs(0)

    _, _, D = t_ref.shape            # block shapes: (1, TB, D) / (1, TB, N)
    _, _, N = tfc_ref.shape

    # ---- init persistent accumulators (scratch is NOT zero-initialized) -----
    @pl.when((bi == 0) & (si == 0))
    def _init_global():
        for r in (base_t_acc, base_fc_acc, emb_t_acc, emb_fc_acc,
                  stg_t_acc, stg_fc_acc, samp_t_acc, samp_fc_acc):
            r[...] = jnp.zeros(r.shape, r.dtype)

    @pl.when(si == 0)                # per-batch-tile sum over stages
    def _init_stage_sum():
        stage_t_buf[...] = jnp.zeros(stage_t_buf.shape, stage_t_buf.dtype)
        stage_fc_buf[...] = jnp.zeros(stage_fc_buf.shape, stage_fc_buf.dtype)

    # ---- per-tile work: one stage x one batch-tile of f32 temporaries live --
    # diff in the native dtype, single upcast (each input read/cast exactly once)
    d_t = (t_ref[0] - s_ref[0]).astype(jnp.float32)          # (TB, D)
    d_fc = (tfc_ref[0] - sfc_ref[0]).astype(jnp.float32)      # (TB, N)

    lt = _elementwise_loss(d_t, loss_type)
    lfc = _elementwise_loss(d_fc, loss_type)

    # base terms: running sum of elementwise loss
    base_t_acc[...] += jnp.sum(lt)
    base_fc_acc[...] += jnp.sum(lfc)

    # embedding-mean terms: per-row mean over the feature dim, then loss, summed
    emb_t_acc[...] += jnp.sum(
        _elementwise_loss(jnp.mean(d_t, axis=1, keepdims=True), loss_type))
    emb_fc_acc[...] += jnp.sum(
        _elementwise_loss(jnp.mean(d_fc, axis=1, keepdims=True), loss_type))

    # sample-mean terms: accumulate sum over batch rows into the row of the
    # (S, K) accumulator belonging to the current stage (mask, no dynamic store)
    srow_t = jnp.sum(d_t, axis=0, keepdims=True)               # (1, D)
    srow_fc = jnp.sum(d_fc, axis=0, keepdims=True)              # (1, N)
    sid_t = jax.lax.broadcasted_iota(jnp.int32, samp_t_acc.shape, 0)
    sid_fc = jax.lax.broadcasted_iota(jnp.int32, samp_fc_acc.shape, 0)
    samp_t_acc[...] += jnp.where(sid_t == si, srow_t, 0.0)
    samp_fc_acc[...] += jnp.where(sid_fc == si, srow_fc, 0.0)

    # stage-mean terms: accumulate sum over stages for this batch tile
    stage_t_buf[...] += d_t
    stage_fc_buf[...] += d_fc

    @pl.when(si == S - 1)
    def _finish_stage_mean():
        stg_t_acc[...] += jnp.sum(
            _elementwise_loss(stage_t_buf[...] * (1.0 / S), loss_type))
        stg_fc_acc[...] += jnp.sum(
            _elementwise_loss(stage_fc_buf[...] * (1.0 / S), loss_type))

    # ---- epilogue: 8 terms -> softmax weights -> weighted sum (one scalar) --
    @pl.when((bi == nb - 1) & (si == S - 1))
    def _finalize():
        ten_base = base_t_acc[...] * (1.0 / (S * B * D))        # (1, 1)
        fc_base = base_fc_acc[...] * (1.0 / (S * B * N))
        ten_e = emb_t_acc[...] * (1.0 / B)
        fc_e = emb_fc_acc[...] * (1.0 / B)
        ten_st = stg_t_acc[...] * (1.0 / (B * D))
        fc_st = stg_fc_acc[...] * (1.0 / (B * N))
        ten_sa = jnp.sum(_elementwise_loss(samp_t_acc[...] * (1.0 / B),
                                           loss_type)) * (1.0 / D)
        fc_sa = jnp.sum(_elementwise_loss(samp_fc_acc[...] * (1.0 / B),
                                          loss_type)) * (1.0 / N)

        # same ordering as the PyTorch module's `loss` list
        terms = [ten_base, fc_base, ten_e, ten_sa, ten_st, fc_e, fc_sa, fc_st]
        used = terms[::-1] if reverse else terms     # opt.reverse is static

        # pack the 8 scalars into lanes 0..7 of a (1,128) vreg and softmax there
        lane = jax.lax.broadcasted_iota(jnp.int32, (1, 128), 1)
        terms_vec = jnp.zeros((1, 128), jnp.float32)
        used_vec = jnp.zeros((1, 128), jnp.float32)
        for i in range(8):
            terms_vec = jnp.where(lane == i, terms[i], terms_vec)
            used_vec = jnp.where(lane == i, used[i], used_vec)

        valid = lane < 8
        m = jnp.max(jnp.where(valid, terms_vec, -1e30))
        e = jnp.where(valid, jnp.exp(terms_vec - m), 0.0)
        denom = jnp.sum(e)
        out_ref[0] = jnp.sum((e / denom) * used_vec)


# ---------------------------------------------------------------------------
# wrapper
# ---------------------------------------------------------------------------
def _pick_batch_tile(B, D, N, itemsize, block_budget_bytes):
    """Largest batch tile whose double-buffered input blocks + f32 stage scratch
    fit the budget; prefers tiles that divide B and are multiples of 8."""
    per_row = 2 * 2 * (D + N) * itemsize + 4 * (D + N)
    max_rows = max(1, block_budget_bytes // per_row)
    if B <= max_rows:
        return B
    divisors = [t for t in range(1, int(max_rows) + 1) if B % t == 0]
    mult8 = [t for t in divisors if t % 8 == 0]
    return (mult8 or divisors)[-1]


def skd_loss(t_tensor, s_tensor, t_fc_tensor, s_fc_tensor, *,
             loss_type='SmoothL1', reverse=False, batch_block=None):
    """Forward pass of SKD_Loss; `reverse` corresponds to opt.reverse."""
    S, B, D = t_tensor.shape
    S2, B2, N = t_fc_tensor.shape
    assert (S, B) == (S2, B2)
    assert s_tensor.shape == t_tensor.shape
    assert s_fc_tensor.shape == t_fc_tensor.shape

    itemsize = max(t_tensor.dtype.itemsize, t_fc_tensor.dtype.itemsize)

    # generation-aware VMEM budget (v7x: 64 MiB physical vs 128 MiB on v5e/v6e)
    try:
        vmem_cap = int(pltpu.get_tpu_info().vmem_capacity_bytes)
    except Exception:
        vmem_cap = 64 * 1024 * 1024          # conservative fallback
    block_budget = min(vmem_cap // 4, 16 * 1024 * 1024)

    if batch_block is not None:
        assert B % batch_block == 0
        tb = int(batch_block)
    else:
        tb = _pick_batch_tile(B, D, N, itemsize, block_budget)
    nb = B // tb

    f32 = jnp.float32
    scratch_shapes = [
        pltpu.VMEM((1, 1), f32),    # base_t
        pltpu.VMEM((1, 1), f32),    # base_fc
        pltpu.VMEM((1, 1), f32),    # emb_t
        pltpu.VMEM((1, 1), f32),    # emb_fc
        pltpu.VMEM((1, 1), f32),    # stage_t (scalar partial)
        pltpu.VMEM((1, 1), f32),    # stage_fc (scalar partial)
        pltpu.VMEM((S, D), f32),    # samp_t : sum over B per stage
        pltpu.VMEM((S, N), f32),    # samp_fc
        pltpu.VMEM((tb, D), f32),   # stage_t_buf : sum over S for current tile
        pltpu.VMEM((tb, N), f32),   # stage_fc_buf
    ]

    # actual VMEM footprint (double-buffered input blocks + scratch), padded
    def _pad_f32(r, c):
        return (math.ceil(r / 8) * 8) * (math.ceil(c / 128) * 128) * 4

    def _ceil128(c):
        return math.ceil(c / 128) * 128

    tbp = math.ceil(tb / 8) * 8
    block_bytes = 2 * 2 * tbp * (_ceil128(D) + _ceil128(N)) * itemsize
    scratch_bytes = (6 * _pad_f32(1, 1) + _pad_f32(S, D) + _pad_f32(S, N)
                     + _pad_f32(tb, D) + _pad_f32(tb, N))
    needed = block_bytes + scratch_bytes + (1 << 20)
    vmem_limit = max(4 * 1024 * 1024,
                     min(needed * 3 // 2, int(vmem_cap * 0.9)))

    inputs = (t_tensor, s_tensor, t_fc_tensor, s_fc_tensor)
    in_bytes = int(sum(x.size * x.dtype.itemsize for x in inputs))
    n_elems = int(sum(x.size for x in inputs))

    emb_spec = pl.BlockSpec((1, tb, D), lambda bi, si: (si, bi, 0))
    fc_spec = pl.BlockSpec((1, tb, N), lambda bi, si: (si, bi, 0))

    out = pl.pallas_call(
        functools.partial(_skd_loss_kernel, S=S, B=B,
                          loss_type=loss_type, reverse=reverse),
        out_shape=jax.ShapeDtypeStruct((1,), jnp.float32),
        grid_spec=pltpu.PrefetchScalarGridSpec(
            num_scalar_prefetch=0,
            grid=(nb, S),
            in_specs=[emb_spec, emb_spec, fc_spec, fc_spec],
            out_specs=pl.BlockSpec(memory_space=pltpu.MemorySpace.SMEM),
            scratch_shapes=scratch_shapes),
        compiler_params=pltpu.CompilerParams(
            dimension_semantics=("arbitrary", "arbitrary"),
            vmem_limit_bytes=int(vmem_limit)),
        cost_estimate=pl.CostEstimate(
            flops=10 * n_elems, transcendentals=8,
            bytes_accessed=in_bytes + 4),
    )(t_tensor, s_tensor, t_fc_tensor, s_fc_tensor)
    return out[0]


# ---------------------------------------------------------------------------
# pure-JAX reference mirroring the PyTorch module (for correctness check)
# ---------------------------------------------------------------------------
def _ref_skd_loss(t_tensor, s_tensor, t_fc_tensor, s_fc_tensor, *,
                  loss_type='SmoothL1', reverse=False):
    def loss_fn(a, b):
        return jnp.mean(_elementwise_loss(a - b, loss_type))

    def embedding_mean_loss(x, y):
        total = 0.0
        for i in range(x.shape[0]):
            total = total + loss_fn(x[i].mean(axis=1), y[i].mean(axis=1))
        return total

    def sample_mean_loss(x, y):
        total = 0.0
        for i in range(x.shape[0]):
            total = total + loss_fn(x[i].mean(axis=0), y[i].mean(axis=0))
        return total

    def stage_mean_loss(x, y):
        return loss_fn(x.mean(axis=0), y.mean(axis=0))

    losses = [
        loss_fn(t_tensor, s_tensor),
        loss_fn(t_fc_tensor, s_fc_tensor),
        embedding_mean_loss(s_tensor, t_tensor),
        sample_mean_loss(s_tensor, t_tensor),
        stage_mean_loss(s_tensor, t_tensor),
        embedding_mean_loss(s_fc_tensor, t_fc_tensor),
        sample_mean_loss(s_fc_tensor, t_fc_tensor),
        stage_mean_loss(s_fc_tensor, t_fc_tensor),
    ]
    losses = jnp.stack(losses)
    factor = jax.nn.softmax(losses)
    used = losses[::-1] if reverse else losses
    return jnp.sum(factor * used)


# ---------------------------------------------------------------------------
if __name__ == "__main__":
    key = jax.random.PRNGKey(0)

    def make_inputs(k, S, B, D, N):
        k0, k1, k2, k3 = jax.random.split(k, 4)
        return (jax.random.normal(k0, (S, B, D), jnp.float32),
                jax.random.normal(k1, (S, B, D), jnp.float32),
                jax.random.normal(k2, (S, B, N), jnp.float32),
                jax.random.normal(k3, (S, B, N), jnp.float32))

    # small shapes consistent with what the upstream SKD module feeds this loss
    small = make_inputs(key, S=2, B=2, D=32, N=16)
    # a larger config that exercises the multi-batch-tile accumulation path
    big = make_inputs(jax.random.PRNGKey(1), S=3, B=16, D=64, N=48)

    configs = [
        (small, 'SmoothL1', False, None),
        (small, 'SmoothL1', True, None),
        (small, 'MSE', False, None),
        (big, 'L1', True, 8),        # grid = (2 batch tiles, 3 stages)
    ]
    for tensors, loss_type, reverse, batch_block in configs:
        got = skd_loss(*tensors, loss_type=loss_type, reverse=reverse,
                       batch_block=batch_block)
        got = jax.block_until_ready(got)
        want = _ref_skd_loss(*tensors, loss_type=loss_type, reverse=reverse)
        want = jax.block_until_ready(want)
        assert got.shape == ()
        assert jnp.allclose(got, want, atol=1e-5, rtol=1e-4), (
            f'mismatch for {loss_type}, reverse={reverse}, '
            f'batch_block={batch_block}: {got} vs {want}')

    print("KERNEL_OK")
</pallas_src>

<mosaic_0001>
module attributes {stable_mosaic.version = 11 : i64} {
  func.func @_skd_loss_kernel(%arg0: i32, %arg1: i32, %arg2: memref<1x2x32xf32, #tpu.memory_space<vmem>>, %arg3: memref<1x2x32xf32, #tpu.memory_space<vmem>>, %arg4: memref<1x2x16xf32, #tpu.memory_space<vmem>>, %arg5: memref<1x2x16xf32, #tpu.memory_space<vmem>>, %arg6: memref<1xf32, #tpu.memory_space<smem>>, %arg7: memref<1x1xf32, #tpu.memory_space<vmem>>, %arg8: memref<1x1xf32, #tpu.memory_space<vmem>>, %arg9: memref<1x1xf32, #tpu.memory_space<vmem>>, %arg10: memref<1x1xf32, #tpu.memory_space<vmem>>, %arg11: memref<1x1xf32, #tpu.memory_space<vmem>>, %arg12: memref<1x1xf32, #tpu.memory_space<vmem>>, %arg13: memref<2x32xf32, #tpu.memory_space<vmem>>, %arg14: memref<2x16xf32, #tpu.memory_space<vmem>>, %arg15: memref<2x32xf32, #tpu.memory_space<vmem>>, %arg16: memref<2x16xf32, #tpu.memory_space<vmem>>) attributes {dimension_semantics = [#tpu.dimension_semantics<arbitrary>, #tpu.dimension_semantics<arbitrary>], iteration_bounds = array<i64: 1, 2>, scalar_prefetch = 0 : i64, scratch_operands = 10 : i64, tpu.core_type = #tpu.core_type<tc>, window_params = [{transform_indices = @transform_0, window_bounds = array<i64: 1, 2, 32>}, {transform_indices = @transform_1, window_bounds = array<i64: 1, 2, 32>}, {transform_indices = @transform_2, window_bounds = array<i64: 1, 2, 16>}, {transform_indices = @transform_3, window_bounds = array<i64: 1, 2, 16>}, {transform_indices = @transform_4, window_bounds = array<i64: 1>}]} {
    %c0_i32 = arith.constant 0 : i32
    %0 = arith.cmpi eq, %arg0, %c0_i32 : i32
    %c0_i32_0 = arith.constant 0 : i32
    %1 = arith.cmpi eq, %arg1, %c0_i32_0 : i32
    %2 = arith.andi %0, %1 : i1
    %3 = arith.extui %2 : i1 to i32
    %c0_i32_1 = arith.constant 0 : i32
    %4 = arith.cmpi ne, %3, %c0_i32_1 : i32
    scf.if %4 {
      %cst_74 = arith.constant 0.000000e+00 : f32
      %132 = vector.broadcast %cst_74 : f32 to vector<1x1xf32>
      %c0_75 = arith.constant 0 : index
      %c0_76 = arith.constant 0 : index
      %133 = vector.load %arg7[%c0_75, %c0_76] : memref<1x1xf32, #tpu.memory_space<vmem>>, vector<1x1xf32>
      tpu.vector_store %arg7[%c0_75, %c0_76], %132 {strides = array<i32>} : memref<1x1xf32, #tpu.memory_space<vmem>>, vector<1x1xf32>,
      %cst_77 = arith.constant 0.000000e+00 : f32
      %134 = vector.broadcast %cst_77 : f32 to vector<1x1xf32>
      %c0_78 = arith.constant 0 : index
      %c0_79 = arith.constant 0 : index
      %135 = vector.load %arg8[%c0_78, %c0_79] : memref<1x1xf32, #tpu.memory_space<vmem>>, vector<1x1xf32>
      tpu.vector_store %arg8[%c0_78, %c0_79], %134 {strides = array<i32>} : memref<1x1xf32, #tpu.memory_space<vmem>>, vector<1x1xf32>,
      %cst_80 = arith.constant 0.000000e+00 : f32
      %136 = vector.broadcast %cst_80 : f32 to vector<1x1xf32>
      %c0_81 = arith.constant 0 : index
      %c0_82 = arith.constant 0 : index
      %137 = vector.load %arg9[%c0_81, %c0_82] : memref<1x1xf32, #tpu.memory_space<vmem>>, vector<1x1xf32>
      tpu.vector_store %arg9[%c0_81, %c0_82], %136 {strides = array<i32>} : memref<1x1xf32, #tpu.memory_space<vmem>>, vector<1x1xf32>,
      %cst_83 = arith.constant 0.000000e+00 : f32
      %138 = vector.broadcast %cst_83 : f32 to vector<1x1xf32>
      %c0_84 = arith.constant 0 : index
      %c0_85 = arith.constant 0 : index
      %139 = vector.load %arg10[%c0_84, %c0_85] : memref<1x1xf32, #tpu.memory_space<vmem>>, vector<1x1xf32>
      tpu.vector_store %arg10[%c0_84, %c0_85], %138 {strides = array<i32>} : memref<1x1xf32, #tpu.memory_space<vmem>>, vector<1x1xf32>,
      %cst_86 = arith.constant 0.000000e+00 : f32
      %140 = vector.broadcast %cst_86 : f32 to vector<1x1xf32>
      %c0_87 = arith.constant 0 : index
      %c0_88 = arith.constant 0 : index
      %141 = vector.load %arg11[%c0_87, %c0_88] : memref<1x1xf32, #tpu.memory_space<vmem>>, vector<1x1xf32>
      tpu.vector_store %arg11[%c0_87, %c0_88], %140 {strides = array<i32>} : memref<1x1xf32, #tpu.memory_space<vmem>>, vector<1x1xf32>,
      %cst_89 = arith.constant 0.000000e+00 : f32
      %142 = vector.broadcast %cst_89 : f32 to vector<1x1xf32>
      %c0_90 = arith.constant 0 : index
      %c0_91 = arith.constant 0 : index
      %143 = vector.load %arg12[%c0_90, %c0_91] : memref<1x1xf32, #tpu.memory_space<vmem>>, vector<1x1xf32>
      tpu.vector_store %arg12[%c0_90, %c0_91], %142 {strides = array<i32>} : memref<1x1xf32, #tpu.memory_space<vmem>>, vector<1x1xf32>,
      %cst_92 = arith.constant 0.000000e+00 : f32
      %144 = vector.broadcast %cst_92 : f32 to vector<2x32xf32>
      %c0_93 = arith.constant 0 : index
      %c0_94 = arith.constant 0 : index
      %145 = vector.load %arg13[%c0_93, %c0_94] : memref<2x32xf32, #tpu.memory_space<vmem>>, vector<2x32xf32>
      tpu.vector_store %arg13[%c0_93, %c0_94], %144 {strides = array<i32>} : memref<2x32xf32, #tpu.memory_space<vmem>>, vector<2x32xf32>,
      %cst_95 = arith.constant 0.000000e+00 : f32
      %146 = vector.broadcast %cst_95 : f32 to vector<2x16xf32>
      %c0_96 = arith.constant 0 : index
      %c0_97 = arith.constant 0 : index
      %147 = vector.load %arg14[%c0_96, %c0_97] : memref<2x16xf32, #tpu.memory_space<vmem>>, vector<2x16xf32>
      tpu.vector_store %arg14[%c0_96, %c0_97], %146 {strides = array<i32>} : memref<2x16xf32, #tpu.memory_space<vmem>>, vector<2x16xf32>,
    } else {
    }
    %c0_i32_2 = arith.constant 0 : i32
    %5 = arith.cmpi eq, %arg1, %c0_i32_2 : i32
    %6 = arith.extui %5 : i1 to i32
    %c0_i32_3 = arith.constant 0 : i32
    %7 = arith.cmpi ne, %6, %c0_i32_3 : i32
    scf.if %7 {
      %cst_74 = arith.constant 0.000000e+00 : f32
      %132 = vector.broadcast %cst_74 : f32 to vector<2x32xf32>
      %c0_75 = arith.constant 0 : index
      %c0_76 = arith.constant 0 : index
      %133 = vector.load %arg15[%c0_75, %c0_76] : memref<2x32xf32, #tpu.memory_space<vmem>>, vector<2x32xf32>
      tpu.vector_store %arg15[%c0_75, %c0_76], %132 {strides = array<i32>} : memref<2x32xf32, #tpu.memory_space<vmem>>, vector<2x32xf32>,
      %cst_77 = arith.constant 0.000000e+00 : f32
      %134 = vector.broadcast %cst_77 : f32 to vector<2x16xf32>
      %c0_78 = arith.constant 0 : index
      %c0_79 = arith.constant 0 : index
      %135 = vector.load %arg16[%c0_78, %c0_79] : memref<2x16xf32, #tpu.memory_space<vmem>>, vector<2x16xf32>
      tpu.vector_store %arg16[%c0_78, %c0_79], %134 {strides = array<i32>} : memref<2x16xf32, #tpu.memory_space<vmem>>, vector<2x16xf32>,
    } else {
    }
    %c0 = arith.constant 0 : index
    %c0_4 = arith.constant 0 : index
    %c0_5 = arith.constant 0 : index
    %8 = vector.load %arg2[%c0, %c0_4, %c0_5] : memref<1x2x32xf32, #tpu.memory_space<vmem>>, vector<1x2x32xf32>
    %9 = vector.shape_cast %8 : vector<1x2x32xf32> to vector<2x32xf32>
    %c0_6 = arith.constant 0 : index
    %c0_7 = arith.constant 0 : index
    %c0_8 = arith.constant 0 : index
    %10 = vector.load %arg3[%c0_6, %c0_7, %c0_8] : memref<1x2x32xf32, #tpu.memory_space<vmem>>, vector<1x2x32xf32>
    %11 = vector.shape_cast %10 : vector<1x2x32xf32> to vector<2x32xf32>
    %12 = arith.subf %9, %11 : vector<2x32xf32>
    %c0_9 = arith.constant 0 : index
    %c0_10 = arith.constant 0 : index
    %c0_11 = arith.constant 0 : index
    %13 = vector.load %arg4[%c0_9, %c0_10, %c0_11] : memref<1x2x16xf32, #tpu.memory_space<vmem>>, vector<1x2x16xf32>
    %14 = vector.shape_cast %13 : vector<1x2x16xf32> to vector<2x16xf32>
    %c0_12 = arith.constant 0 : index
    %c0_13 = arith.constant 0 : index
    %c0_14 = arith.constant 0 : index
    %15 = vector.load %arg5[%c0_12, %c0_13, %c0_14] : memref<1x2x16xf32, #tpu.memory_space<vmem>>, vector<1x2x16xf32>
    %16 = vector.shape_cast %15 : vector<1x2x16xf32> to vector<2x16xf32>
    %17 = arith.subf %14, %16 : vector<2x16xf32>
    %18 = math.absf %12 : vector<2x32xf32>
    %cst = arith.constant 1.000000e+00 : f32
    %19 = vector.broadcast %cst : f32 to vector<2x32xf32>
    %20 = arith.cmpf olt, %18, %19 : vector<2x32xf32>
    %cst_15 = arith.constant 5.000000e-01 : f32
    %21 = vector.broadcast %cst_15 : f32 to vector<2x32xf32>
    %22 = arith.mulf %21, %12 : vector<2x32xf32>
    %23 = arith.mulf %22, %12 : vector<2x32xf32>
    %cst_16 = arith.constant 5.000000e-01 : f32
    %24 = vector.broadcast %cst_16 : f32 to vector<2x32xf32>
    %25 = arith.subf %18, %24 : vector<2x32xf32>
    %26 = arith.select %20, %23, %25 : vector<2x32xi1>, vector<2x32xf32>
    %27 = math.absf %17 : vector<2x16xf32>
    %cst_17 = arith.constant 1.000000e+00 : f32
    %28 = vector.broadcast %cst_17 : f32 to vector<2x16xf32>
    %29 = arith.cmpf olt, %27, %28 : vector<2x16xf32>
    %cst_18 = arith.constant 5.000000e-01 : f32
    %30 = vector.broadcast %cst_18 : f32 to vector<2x16xf32>
    %31 = arith.mulf %30, %17 : vector<2x16xf32>
    %32 = arith.mulf %31, %17 : vector<2x16xf32>
    %cst_19 = arith.constant 5.000000e-01 : f32
    %33 = vector.broadcast %cst_19 : f32 to vector<2x16xf32>
    %34 = arith.subf %27, %33 : vector<2x16xf32>
    %35 = arith.select %29, %32, %34 : vector<2x16xi1>, vector<2x16xf32>
    %c0_20 = arith.constant 0 : index
    %c0_21 = arith.constant 0 : index
    %36 = vector.load %arg7[%c0_20, %c0_21] : memref<1x1xf32, #tpu.memory_space<vmem>>, vector<1x1xf32>
    %37 = vector.shape_cast %26 : vector<2x32xf32> to vector<1x2x32xf32>
    %cst_22 = arith.constant dense<0.000000e+00> : vector<1xf32>
    %38 = vector.multi_reduction <add>, %37, %cst_22 [1, 2] : vector<1x2x32xf32> to vector<1xf32>
    %39 = vector.shape_cast %38 : vector<1xf32> to vector<1x1x1xf32>
    %40 = vector.extract %39[0, 0, 0] : f32 from vector<1x1x1xf32>
    %41 = vector.broadcast %40 : f32 to vector<1x1xf32>
    %42 = arith.addf %36, %41 : vector<1x1xf32>
    %c0_23 = arith.constant 0 : index
    %c0_24 = arith.constant 0 : index
    %43 = vector.load %arg7[%c0_23, %c0_24] : memref<1x1xf32, #tpu.memory_space<vmem>>, vector<1x1xf32>
    tpu.vector_store %arg7[%c0_23, %c0_24], %42 {strides = array<i32>} : memref<1x1xf32, #tpu.memory_space<vmem>>, vector<1x1xf32>,
    %c0_25 = arith.constant 0 : index
    %c0_26 = arith.constant 0 : index
    %44 = vector.load %arg8[%c0_25, %c0_26] : memref<1x1xf32, #tpu.memory_space<vmem>>, vector<1x1xf32>
    %45 = vector.shape_cast %35 : vector<2x16xf32> to vector<1x2x16xf32>
    %cst_27 = arith.constant dense<0.000000e+00> : vector<1xf32>
    %46 = vector.multi_reduction <add>, %45, %cst_27 [1, 2] : vector<1x2x16xf32> to vector<1xf32>
    %47 = vector.shape_cast %46 : vector<1xf32> to vector<1x1x1xf32>
    %48 = vector.extract %47[0, 0, 0] : f32 from vector<1x1x1xf32>
    %49 = vector.broadcast %48 : f32 to vector<1x1xf32>
    %50 = arith.addf %44, %49 : vector<1x1xf32>
    %c0_28 = arith.constant 0 : index
    %c0_29 = arith.constant 0 : index
    %51 = vector.load %arg8[%c0_28, %c0_29] : memref<1x1xf32, #tpu.memory_space<vmem>>, vector<1x1xf32>
    tpu.vector_store %arg8[%c0_28, %c0_29], %50 {strides = array<i32>} : memref<1x1xf32, #tpu.memory_space<vmem>>, vector<1x1xf32>,
    %c0_30 = arith.constant 0 : index
    %c0_31 = arith.constant 0 : index
    %52 = vector.load %arg9[%c0_30, %c0_31] : memref<1x1xf32, #tpu.memory_space<vmem>>, vector<1x1xf32>
    %cst_32 = arith.constant dense<0.000000e+00> : vector<2xf32>
    %53 = vector.multi_reduction <add>, %12, %cst_32 [1] : vector<2x32xf32> to vector<2xf32>
    %54 = vector.shape_cast %53 : vector<2xf32> to vector<2x1xf32>
    %cst_33 = arith.constant 3.200000e+01 : f32
    %55 = vector.broadcast %cst_33 : f32 to vector<2x1xf32>
    %56 = arith.divf %54, %55 : vector<2x1xf32>
    %57 = math.absf %56 : vector<2x1xf32>
    %cst_34 = arith.constant 1.000000e+00 : f32
    %58 = vector.broadcast %cst_34 : f32 to vector<2x1xf32>
    %59 = arith.cmpf olt, %57, %58 : vector<2x1xf32>
    %cst_35 = arith.constant 5.000000e-01 : f32
    %60 = vector.broadcast %cst_35 : f32 to vector<2x1xf32>
    %61 = arith.mulf %60, %56 : vector<2x1xf32>
    %62 = arith.mulf %61, %56 : vector<2x1xf32>
    %cst_36 = arith.constant 5.000000e-01 : f32
    %63 = vector.broadcast %cst_36 : f32 to vector<2x1xf32>
    %64 = arith.subf %57, %63 : vector<2x1xf32>
    %65 = arith.select %59, %62, %64 : vector<2x1xi1>, vector<2x1xf32>
    %66 = vector.shape_cast %65 : vector<2x1xf32> to vector<1x2x1xf32>
    %cst_37 = arith.constant dense<0.000000e+00> : vector<1xf32>
    %67 = vector.multi_reduction <add>, %66, %cst_37 [1, 2] : vector<1x2x1xf32> to vector<1xf32>
    %68 = vector.shape_cast %67 : vector<1xf32> to vector<1x1x1xf32>
    %69 = vector.extract %68[0, 0, 0] : f32 from vector<1x1x1xf32>
    %70 = vector.broadcast %69 : f32 to vector<1x1xf32>
    %71 = arith.addf %52, %70 : vector<1x1xf32>
    %c0_38 = arith.constant 0 : index
    %c0_39 = arith.constant 0 : index
    %72 = vector.load %arg9[%c0_38, %c0_39] : memref<1x1xf32, #tpu.memory_space<vmem>>, vector<1x1xf32>
    tpu.vector_store %arg9[%c0_38, %c0_39], %71 {strides = array<i32>} : memref<1x1xf32, #tpu.memory_space<vmem>>, vector<1x1xf32>,
    %c0_40 = arith.constant 0 : index
    %c0_41 = arith.constant 0 : index
    %73 = vector.load %arg10[%c0_40, %c0_41] : memref<1x1xf32, #tpu.memory_space<vmem>>, vector<1x1xf32>
    %cst_42 = arith.constant dense<0.000000e+00> : vector<2xf32>
    %74 = vector.multi_reduction <add>, %17, %cst_42 [1] : vector<2x16xf32> to vector<2xf32>
    %75 = vector.shape_cast %74 : vector<2xf32> to vector<2x1xf32>
    %cst_43 = arith.constant 1.600000e+01 : f32
    %76 = vector.broadcast %cst_43 : f32 to vector<2x1xf32>
    %77 = arith.divf %75, %76 : vector<2x1xf32>
    %78 = math.absf %77 : vector<2x1xf32>
    %cst_44 = arith.constant 1.000000e+00 : f32
    %79 = vector.broadcast %cst_44 : f32 to vector<2x1xf32>
    %80 = arith.cmpf olt, %78, %79 : vector<2x1xf32>
    %cst_45 = arith.constant 5.000000e-01 : f32
    %81 = vector.broadcast %cst_45 : f32 to vector<2x1xf32>
    %82 = arith.mulf %81, %77 : vector<2x1xf32>
    %83 = arith.mulf %82, %77 : vector<2x1xf32>
    %cst_46 = arith.constant 5.000000e-01 : f32
    %84 = vector.broadcast %cst_46 : f32 to vector<2x1xf32>
    %85 = arith.subf %78, %84 : vector<2x1xf32>
    %86 = arith.select %80, %83, %85 : vector<2x1xi1>, vector<2x1xf32>
    %87 = vector.shape_cast %86 : vector<2x1xf32> to vector<1x2x1xf32>
    %cst_47 = arith.constant dense<0.000000e+00> : vector<1xf32>
    %88 = vector.multi_reduction <add>, %87, %cst_47 [1, 2] : vector<1x2x1xf32> to vector<1xf32>
    %89 = vector.shape_cast %88 : vector<1xf32> to vector<1x1x1xf32>
    %90 = vector.extract %89[0, 0, 0] : f32 from vector<1x1x1xf32>
    %91 = vector.broadcast %90 : f32 to vector<1x1xf32>
    %92 = arith.addf %73, %91 : vector<1x1xf32>
    %c0_48 = arith.constant 0 : index
    %c0_49 = arith.constant 0 : index
    %93 = vector.load %arg10[%c0_48, %c0_49] : memref<1x1xf32, #tpu.memory_space<vmem>>, vector<1x1xf32>
    tpu.vector_store %arg10[%c0_48, %c0_49], %92 {strides = array<i32>} : memref<1x1xf32, #tpu.memory_space<vmem>>, vector<1x1xf32>,
    %cst_50 = arith.constant dense<0.000000e+00> : vector<32xf32>
    %94 = vector.multi_reduction <add>, %12, %cst_50 [0] : vector<2x32xf32> to vector<32xf32>
    %95 = vector.shape_cast %94 : vector<32xf32> to vector<1x32xf32>
    %cst_51 = arith.constant dense<0.000000e+00> : vector<16xf32>
    %96 = vector.multi_reduction <add>, %17, %cst_51 [0] : vector<2x16xf32> to vector<16xf32>
    %97 = vector.shape_cast %96 : vector<16xf32> to vector<1x16xf32>
    %98 = tpu.iota {dimensions = array<i32: 0>} : vector<2x32xi32>
    %99 = tpu.iota {dimensions = array<i32: 0>} : vector<2x16xi32>
    %c0_52 = arith.constant 0 : index
    %c0_53 = arith.constant 0 : index
    %100 = vector.load %arg13[%c0_52, %c0_53] : memref<2x32xf32, #tpu.memory_space<vmem>>, vector<2x32xf32>
    %101 = vector.broadcast %arg1 : i32 to vector<2x32xi32>
    %102 = arith.cmpi eq, %98, %101 : vector<2x32xi32>
    %cst_54 = arith.constant 0.000000e+00 : f32
    %103 = vector.shape_cast %95 : vector<1x32xf32> to vector<1x32xf32>
    %104 = vector.broadcast %103 : vector<1x32xf32> to vector<2x32xf32>
    %105 = vector.broadcast %cst_54 : f32 to vector<2x32xf32>
    %106 = arith.select %102, %104, %105 : vector<2x32xi1>, vector<2x32xf32>
    %107 = arith.addf %100, %106 : vector<2x32xf32>
    %c0_55 = arith.constant 0 : index
    %c0_56 = arith.constant 0 : index
    %108 = vector.load %arg13[%c0_55, %c0_56] : memref<2x32xf32, #tpu.memory_space<vmem>>, vector<2x32xf32>
    tpu.vector_store %arg13[%c0_55, %c0_56], %107 {strides = array<i32>} : memref<2x32xf32, #tpu.memory_space<vmem>>, vector<2x32xf32>,
    %c0_57 = arith.constant 0 : index
    %c0_58 = arith.constant 0 : index
    %109 = vector.load %arg14[%c0_57, %c0_58] : memref<2x16xf32, #tpu.memory_space<vmem>>, vector<2x16xf32>
    %110 = vector.broadcast %arg1 : i32 to vector<2x16xi32>
    %111 = arith.cmpi eq, %99, %110 : vector<2x16xi32>
    %cst_59 = arith.constant 0.000000e+00 : f32
    %112 = vector.shape_cast %97 : vector<1x16xf32> to vector<1x16xf32>
    %113 = vector.broadcast %112 : vector<1x16xf32> to vector<2x16xf32>
    %114 = vector.broadcast %cst_59 : f32 to vector<2x16xf32>
    %115 = arith.select %111, %113, %114 : vector<2x16xi1>, vector<2x16xf32>
    %116 = arith.addf %109, %115 : vector<2x16xf32>
    %c0_60 = arith.constant 0 : index
    %c0_61 = arith.constant 0 : index
    %117 = vector.load %arg14[%c0_60, %c0_61] : memref<2x16xf32, #tpu.memory_space<vmem>>, vector<2x16xf32>
    tpu.vector_store %arg14[%c0_60, %c0_61], %116 {strides = array<i32>} : memref<2x16xf32, #tpu.memory_space<vmem>>, vector<2x16xf32>,
    %c0_62 = arith.constant 0 : index
    %c0_63 = arith.constant 0 : index
    %118 = vector.load %arg15[%c0_62, %c0_63] : memref<2x32xf32, #tpu.memory_space<vmem>>, vector<2x32xf32>
    %119 = arith.addf %118, %12 : vector<2x32xf32>
    %c0_64 = arith.constant 0 : index
    %c0_65 = arith.constant 0 : index
    %120 = vector.load %arg15[%c0_64, %c0_65] : memref<2x32xf32, #tpu.memory_space<vmem>>, vector<2x32xf32>
    tpu.vector_store %arg15[%c0_64, %c0_65], %119 {strides = array<i32>} : memref<2x32xf32, #tpu.memory_space<vmem>>, vector<2x32xf32>,
    %c0_66 = arith.constant 0 : index
    %c0_67 = arith.constant 0 : index
    %121 = vector.load %arg16[%c0_66, %c0_67] : memref<2x16xf32, #tpu.memory_space<vmem>>, vector<2x16xf32>
    %122 = arith.addf %121, %17 : vector<2x16xf32>
    %c0_68 = arith.constant 0 : index
    %c0_69 = arith.constant 0 : index
    %123 = vector.load %arg16[%c0_68, %c0_69] : memref<2x16xf32, #tpu.memory_space<vmem>>, vector<2x16xf32>
    tpu.vector_store %arg16[%c0_68, %c0_69], %122 {strides = array<i32>} : memref<2x16xf32, #tpu.memory_space<vmem>>, vector<2x16xf32>,
    %c1_i32 = arith.constant 1 : i32
    %124 = arith.cmpi eq, %arg1, %c1_i32 : i32
    %125 = arith.extui %124 : i1 to i32
    %c0_i32_70 = arith.constant 0 : i32
    %126 = arith.cmpi ne, %125, %c0_i32_70 : i32
    scf.if %126 {
      %c0_74 = arith.constant 0 : index
      %c0_75 = arith.constant 0 : index
      %132 = vector.load %arg11[%c0_74, %c0_75] : memref<1x1xf32, #tpu.memory_space<vmem>>, vector<1x1xf32>
      %c0_76 = arith.constant 0 : index
      %c0_77 = arith.constant 0 : index
      %133 = vector.load %arg15[%c0_76, %c0_77] : memref<2x32xf32, #tpu.memory_space<vmem>>, vector<2x32xf32>
      %cst_78 = arith.constant 5.000000e-01 : f32
      %134 = vector.broadcast %cst_78 : f32 to vector<2x32xf32>
      %135 = arith.mulf %133, %134 : vector<2x32xf32>
      %136 = math.absf %135 : vector<2x32xf32>
      %cst_79 = arith.constant 1.000000e+00 : f32
      %137 = vector.broadcast %cst_79 : f32 to vector<2x32xf32>
      %138 = arith.cmpf olt, %136, %137 : vector<2x32xf32>
      %cst_80 = arith.constant 5.000000e-01 : f32
      %139 = vector.broadcast %cst_80 : f32 to vector<2x32xf32>
      %140 = arith.mulf %139, %135 : vector<2x32xf32>
      %141 = arith.mulf %140, %135 : vector<2x32xf32>
      %cst_81 = arith.constant 5.000000e-01 : f32
      %142 = vector.broadcast %cst_81 : f32 to vector<2x32xf32>
      %143 = arith.subf %136, %142 : vector<2x32xf32>
      %144 = arith.select %138, %141, %143 : vector<2x32xi1>, vector<2x32xf32>
      %145 = vector.shape_cast %144 : vector<2x32xf32> to vector<1x2x32xf32>
      %cst_82 = arith.constant dense<0.000000e+00> : vector<1xf32>
      %146 = vector.multi_reduction <add>, %145, %cst_82 [1, 2] : vector<1x2x32xf32> to vector<1xf32>
      %147 = vector.shape_cast %146 : vector<1xf32> to vector<1x1x1xf32>
      %148 = vector.extract %147[0, 0, 0] : f32 from vector<1x1x1xf32>
      %149 = vector.broadcast %148 : f32 to vector<1x1xf32>
      %150 = arith.addf %132, %149 : vector<1x1xf32>
      %c0_83 = arith.constant 0 : index
      %c0_84 = arith.constant 0 : index
      %151 = vector.load %arg11[%c0_83, %c0_84] : memref<1x1xf32, #tpu.memory_space<vmem>>, vector<1x1xf32>
      tpu.vector_store %arg11[%c0_83, %c0_84], %150 {strides = array<i32>} : memref<1x1xf32, #tpu.memory_space<vmem>>, vector<1x1xf32>,
      %c0_85 = arith.constant 0 : index
      %c0_86 = arith.constant 0 : index
      %152 = vector.load %arg12[%c0_85, %c0_86] : memref<1x1xf32, #tpu.memory_space<vmem>>, vector<1x1xf32>
      %c0_87 = arith.constant 0 : index
      %c0_88 = arith.constant 0 : index
      %153 = vector.load %arg16[%c0_87, %c0_88] : memref<2x16xf32, #tpu.memory_space<vmem>>, vector<2x16xf32>
      %cst_89 = arith.constant 5.000000e-01 : f32
      %154 = vector.broadcast %cst_89 : f32 to vector<2x16xf32>
      %155 = arith.mulf %153, %154 : vector<2x16xf32>
      %156 = math.absf %155 : vector<2x16xf32>
      %cst_90 = arith.constant 1.000000e+00 : f32
      %157 = vector.broadcast %cst_90 : f32 to vector<2x16xf32>
      %158 = arith.cmpf olt, %156, %157 : vector<2x16xf32>
      %cst_91 = arith.constant 5.000000e-01 : f32
      %159 = vector.broadcast %cst_91 : f32 to vector<2x16xf32>
      %160 = arith.mulf %159, %155 : vector<2x16xf32>
      %161 = arith.mulf %160, %155 : vector<2x16xf32>
      %cst_92 = arith.constant 5.000000e-01 : f32
      %162 = vector.broadcast %cst_92 : f32 to vector<2x16xf32>
      %163 = arith.subf %156, %162 : vector<2x16xf32>
      %164 = arith.select %158, %161, %163 : vector<2x16xi1>, vector<2x16xf32>
      %165 = vector.shape_cast %164 : vector<2x16xf32> to vector<1x2x16xf32>
      %cst_93 = arith.constant dense<0.000000e+00> : vector<1xf32>
      %166 = vector.multi_reduction <add>, %165, %cst_93 [1, 2] : vector<1x2x16xf32> to vector<1xf32>
      %167 = vector.shape_cast %166 : vector<1xf32> to vector<1x1x1xf32>
      %168 = vector.extract %167[0, 0, 0] : f32 from vector<1x1x1xf32>
      %169 = vector.broadcast %168 : f32 to vector<1x1xf32>
      %170 = arith.addf %152, %169 : vector<1x1xf32>
      %c0_94 = arith.constant 0 : index
      %c0_95 = arith.constant 0 : index
      %171 = vector.load %arg12[%c0_94, %c0_95] : memref<1x1xf32, #tpu.memory_space<vmem>>, vector<1x1xf32>
      tpu.vector_store %arg12[%c0_94, %c0_95], %170 {strides = array<i32>} : memref<1x1xf32, #tpu.memory_space<vmem>>, vector<1x1xf32>,
    } else {
    }
    %c0_i32_71 = arith.constant 0 : i32
    %127 = arith.cmpi eq, %arg0, %c0_i32_71 : i32
    %c1_i32_72 = arith.constant 1 : i32
    %128 = arith.cmpi eq, %arg1, %c1_i32_72 : i32
    %129 = arith.andi %127, %128 : i1
    %130 = arith.extui %129 : i1 to i32
    %c0_i32_73 = arith.constant 0 : i32
    %131 = arith.cmpi ne, %130, %c0_i32_73 : i32
    scf.if %131 {
      %c0_74 = arith.constant 0 : index
      %c0_75 = arith.constant 0 : index
      %132 = vector.load %arg7[%c0_74, %c0_75] : memref<1x1xf32, #tpu.memory_space<vmem>>, vector<1x1xf32>
      %cst_76 = arith.constant 7.812500e-03 : f32
      %133 = vector.broadcast %cst_76 : f32 to vector<1x1xf32>
      %134 = arith.mulf %132, %133 : vector<1x1xf32>
      %c0_77 = arith.constant 0 : index
      %c0_78 = arith.constant 0 : index
      %135 = vector.load %arg8[%c0_77, %c0_78] : memref<1x1xf32, #tpu.memory_space<vmem>>, vector<1x1xf32>
      %cst_79 = arith.constant 1.562500e-02 : f32
      %136 = vector.broadcast %cst_79 : f32 to vector<1x1xf32>
      %137 = arith.mulf %135, %136 : vector<1x1xf32>
      %c0_80 = arith.constant 0 : index
      %c0_81 = arith.constant 0 : index
      %138 = vector.load %arg9[%c0_80, %c0_81] : memref<1x1xf32, #tpu.memory_space<vmem>>, vector<1x1xf32>
      %cst_82 = arith.constant 5.000000e-01 : f32
      %139 = vector.broadcast %cst_82 : f32 to vector<1x1xf32>
      %140 = arith.mulf %138, %139 : vector<1x1xf32>
      %c0_83 = arith.constant 0 : index
      %c0_84 = arith.constant 0 : index
      %141 = vector.load %arg10[%c0_83, %c0_84] : memref<1x1xf32, #tpu.memory_space<vmem>>, vector<1x1xf32>
      %cst_85 = arith.constant 5.000000e-01 : f32
      %142 = vector.broadcast %cst_85 : f32 to vector<1x1xf32>
      %143 = arith.mulf %141, %142 : vector<1x1xf32>
      %c0_86 = arith.constant 0 : index
      %c0_87 = arith.constant 0 : index
      %144 = vector.load %arg11[%c0_86, %c0_87] : memref<1x1xf32, #tpu.memory_space<vmem>>, vector<1x1xf32>
      %cst_88 = arith.constant 1.562500e-02 : f32
      %145 = vector.broadcast %cst_88 : f32 to vector<1x1xf32>
      %146 = arith.mulf %144, %145 : vector<1x1xf32>
      %c0_89 = arith.constant 0 : index
      %c0_90 = arith.constant 0 : index
      %147 = vector.load %arg12[%c0_89, %c0_90] : memref<1x1xf32, #tpu.memory_space<vmem>>, vector<1x1xf32>
      %cst_91 = arith.constant 3.125000e-02 : f32
      %148 = vector.broadcast %cst_91 : f32 to vector<1x1xf32>
      %149 = arith.mulf %147, %148 : vector<1x1xf32>
      %c0_92 = arith.constant 0 : index
      %c0_93 = arith.constant 0 : index
      %150 = vector.load %arg13[%c0_92, %c0_93] : memref<2x32xf32, #tpu.memory_space<vmem>>, vector<2x32xf32>
      %cst_94 = arith.constant 5.000000e-01 : f32
      %151 = vector.broadcast %cst_94 : f32 to vector<2x32xf32>
      %152 = arith.mulf %150, %151 : vector<2x32xf32>
      %153 = math.absf %152 : vector<2x32xf32>
      %cst_95 = arith.constant 1.000000e+00 : f32
      %154 = vector.broadcast %cst_95 : f32 to vector<2x32xf32>
      %155 = arith.cmpf olt, %153, %154 : vector<2x32xf32>
      %cst_96 = arith.constant 5.000000e-01 : f32
      %156 = vector.broadcast %cst_96 : f32 to vector<2x32xf32>
      %157 = arith.mulf %156, %152 : vector<2x32xf32>
      %158 = arith.mulf %157, %152 : vector<2x32xf32>
      %cst_97 = arith.constant 5.000000e-01 : f32
      %159 = vector.broadcast %cst_97 : f32 to vector<2x32xf32>
      %160 = arith.subf %153, %159 : vector<2x32xf32>
      %161 = arith.select %155, %158, %160 : vector<2x32xi1>, vector<2x32xf32>
      %162 = vector.shape_cast %161 : vector<2x32xf32> to vector<1x2x32xf32>
      %cst_98 = arith.constant dense<0.000000e+00> : vector<1xf32>
      %163 = vector.multi_reduction <add>, %162, %cst_98 [1, 2] : vector<1x2x32xf32> to vector<1xf32>
      %164 = vector.shape_cast %163 : vector<1xf32> to vector<1x1x1xf32>
      %165 = vector.extract %164[0, 0, 0] : f32 from vector<1x1x1xf32>
      %cst_99 = arith.constant 3.125000e-02 : f32
      %166 = arith.mulf %165, %cst_99 : f32
      %c0_100 = arith.constant 0 : index
      %c0_101 = arith.constant 0 : index
      %167 = vector.load %arg14[%c0_100, %c0_101] : memref<2x16xf32, #tpu.memory_space<vmem>>, vector<2x16xf32>
      %cst_102 = arith.constant 5.000000e-01 : f32
      %168 = vector.broadcast %cst_102 : f32 to vector<2x16xf32>
      %169 = arith.mulf %167, %168 : vector<2x16xf32>
      %170 = math.absf %169 : vector<2x16xf32>
      %cst_103 = arith.constant 1.000000e+00 : f32
      %171 = vector.broadcast %cst_103 : f32 to vector<2x16xf32>
      %172 = arith.cmpf olt, %170, %171 : vector<2x16xf32>
      %cst_104 = arith.constant 5.000000e-01 : f32
      %173 = vector.broadcast %cst_104 : f32 to vector<2x16xf32>
      %174 = arith.mulf %173, %169 : vector<2x16xf32>
      %175 = arith.mulf %174, %169 : vector<2x16xf32>
      %cst_105 = arith.constant 5.000000e-01 : f32
      %176 = vector.broadcast %cst_105 : f32 to vector<2x16xf32>
      %177 = arith.subf %170, %176 : vector<2x16xf32>
      %178 = arith.select %172, %175, %177 : vector<2x16xi1>, vector<2x16xf32>
      %179 = vector.shape_cast %178 : vector<2x16xf32> to vector<1x2x16xf32>
      %cst_106 = arith.constant dense<0.000000e+00> : vector<1xf32>
      %180 = vector.multi_reduction <add>, %179, %cst_106 [1, 2] : vector<1x2x16xf32> to vector<1xf32>
      %181 = vector.shape_cast %180 : vector<1xf32> to vector<1x1x1xf32>
      %182 = vector.extract %181[0, 0, 0] : f32 from vector<1x1x1xf32>
      %cst_107 = arith.constant 6.250000e-02 : f32
      %183 = arith.mulf %182, %cst_107 : f32
      %184 = tpu.iota {dimensions = array<i32: 1>} : vector<1x128xi32>
      %cst_108 = arith.constant 0.000000e+00 : f32
      %185 = vector.broadcast %cst_108 : f32 to vector<1x128xf32>
      %cst_109 = arith.constant 0.000000e+00 : f32
      %186 = vector.broadcast %cst_109 : f32 to vector<1x128xf32>
      %c0_i32_110 = arith.constant 0 : i32
      %187 = vector.broadcast %c0_i32_110 : i32 to vector<1x128xi32>
      %188 = arith.cmpi eq, %184, %187 : vector<1x128xi32>
      %189 = vector.shape_cast %134 : vector<1x1xf32> to vector<1x1xf32>
      %190 = vector.broadcast %189 : vector<1x1xf32> to vector<1x128xf32>
      %191 = arith.select %188, %190, %185 : vector<1x128xi1>, vector<1x128xf32>
      %c0_i32_111 = arith.constant 0 : i32
      %192 = vector.broadcast %c0_i32_111 : i32 to vector<1x128xi32>
      %193 = arith.cmpi eq, %184, %192 : vector<1x128xi32>
      %194 = vector.shape_cast %134 : vector<1x1xf32> to vector<1x1xf32>
      %195 = vector.broadcast %194 : vector<1x1xf32> to vector<1x128xf32>
      %196 = arith.select %193, %195, %186 : vector<1x128xi1>, vector<1x128xf32>
      %c1_i32_112 = arith.constant 1 : i32
      %197 = vector.broadcast %c1_i32_112 : i32 to vector<1x128xi32>
      %198 = arith.cmpi eq, %184, %197 : vector<1x128xi32>
      %199 = vector.shape_cast %137 : vector<1x1xf32> to vector<1x1xf32>
      %200 = vector.broadcast %199 : vector<1x1xf32> to vector<1x128xf32>
      %201 = arith.select %198, %200, %191 : vector<1x128xi1>, vector<1x128xf32>
      %c1_i32_113 = arith.constant 1 : i32
      %202 = vector.broadcast %c1_i32_113 : i32 to vector<1x128xi32>
      %203 = arith.cmpi eq, %184, %202 : vector<1x128xi32>
      %204 = vector.shape_cast %137 : vector<1x1xf32> to vector<1x1xf32>
      %205 = vector.broadcast %204 : vector<1x1xf32> to vector<1x128xf32>
      %206 = arith.select %203, %205, %196 : vector<1x128xi1>, vector<1x128xf32>
      %c2_i32 = arith.constant 2 : i32
      %207 = vector.broadcast %c2_i32 : i32 to vector<1x128xi32>
      %208 = arith.cmpi eq, %184, %207 : vector<1x128xi32>
      %209 = vector.shape_cast %140 : vector<1x1xf32> to vector<1x1xf32>
      %210 = vector.broadcast %209 : vector<1x1xf32> to vector<1x128xf32>
      %211 = arith.select %208, %210, %201 : vector<1x128xi1>, vector<1x128xf32>
      %c2_i32_114 = arith.constant 2 : i32
      %212 = vector.broadcast %c2_i32_114 : i32 to vector<1x128xi32>
      %213 = arith.cmpi eq, %184, %212 : vector<1x128xi32>
      %214 = vector.shape_cast %140 : vector<1x1xf32> to vector<1x1xf32>
      %215 = vector.broadcast %214 : vector<1x1xf32> to vector<1x128xf32>
      %216 = arith.select %213, %215, %206 : vector<1x128xi1>, vector<1x128xf32>
      %c3_i32 = arith.constant 3 : i32
      %217 = vector.broadcast %c3_i32 : i32 to vector<1x128xi32>
      %218 = arith.cmpi eq, %184, %217 : vector<1x128xi32>
      %219 = vector.broadcast %166 : f32 to vector<1x128xf32>
      %220 = arith.select %218, %219, %211 : vector<1x128xi1>, vector<1x128xf32>
      %c3_i32_115 = arith.constant 3 : i32
      %221 = vector.broadcast %c3_i32_115 : i32 to vector<1x128xi32>
      %222 = arith.cmpi eq, %184, %221 : vector<1x128xi32>
      %223 = vector.broadcast %166 : f32 to vector<1x128xf32>
      %224 = arith.select %222, %223, %216 : vector<1x128xi1>, vector<1x128xf32>
      %c4_i32 = arith.constant 4 : i32
      %225 = vector.broadcast %c4_i32 : i32 to vector<1x128xi32>
      %226 = arith.cmpi eq, %184, %225 : vector<1x128xi32>
      %227 = vector.shape_cast %146 : vector<1x1xf32> to vector<1x1xf32>
      %228 = vector.broadcast %227 : vector<1x1xf32> to vector<1x128xf32>
      %229 = arith.select %226, %228, %220 : vector<1x128xi1>, vector<1x128xf32>
      %c4_i32_116 = arith.constant 4 : i32
      %230 = vector.broadcast %c4_i32_116 : i32 to vector<1x128xi32>
      %231 = arith.cmpi eq, %184, %230 : vector<1x128xi32>
      %232 = vector.shape_cast %146 : vector<1x1xf32> to vector<1x1xf32>
      %233 = vector.broadcast %232 : vector<1x1xf32> to vector<1x128xf32>
      %234 = arith.select %231, %233, %224 : vector<1x128xi1>, vector<1x128xf32>
      %c5_i32 = arith.constant 5 : i32
      %235 = vector.broadcast %c5_i32 : i32 to vector<1x128xi32>
      %236 = arith.cmpi eq, %184, %235 : vector<1x128xi32>
      %237 = vector.shape_cast %143 : vector<1x1xf32> to vector<1x1xf32>
      %238 = vector.broadcast %237 : vector<1x1xf32> to vector<1x128xf32>
      %239 = arith.select %236, %238, %229 : vector<1x128xi1>, vector<1x128xf32>
      %c5_i32_117 = arith.constant 5 : i32
      %240 = vector.broadcast %c5_i32_117 : i32 to vector<1x128xi32>
      %241 = arith.cmpi eq, %184, %240 : vector<1x128xi32>
      %242 = vector.shape_cast %143 : vector<1x1xf32> to vector<1x1xf32>
      %243 = vector.broadcast %242 : vector<1x1xf32> to vector<1x128xf32>
      %244 = arith.select %241, %243, %234 : vector<1x128xi1>, vector<1x128xf32>
      %c6_i32 = arith.constant 6 : i32
      %245 = vector.broadcast %c6_i32 : i32 to vector<1x128xi32>
      %246 = arith.cmpi eq, %184, %245 : vector<1x128xi32>
      %247 = vector.broadcast %183 : f32 to vector<1x128xf32>
      %248 = arith.select %246, %247, %239 : vector<1x128xi1>, vector<1x128xf32>
      %c6_i32_118 = arith.constant 6 : i32
      %249 = vector.broadcast %c6_i32_118 : i32 to vector<1x128xi32>
      %250 = arith.cmpi eq, %184, %249 : vector<1x128xi32>
      %251 = vector.broadcast %183 : f32 to vector<1x128xf32>
      %252 = arith.select %250, %251, %244 : vector<1x128xi1>, vector<1x128xf32>
      %c7_i32 = arith.constant 7 : i32
      %253 = vector.broadcast %c7_i32 : i32 to vector<1x128xi32>
      %254 = arith.cmpi eq, %184, %253 : vector<1x128xi32>
      %255 = vector.shape_cast %149 : vector<1x1xf32> to vector<1x1xf32>
      %256 = vector.broadcast %255 : vector<1x1xf32> to vector<1x128xf32>
      %257 = arith.select %254, %256, %248 : vector<1x128xi1>, vector<1x128xf32>
      %c7_i32_119 = arith.constant 7 : i32
      %258 = vector.broadcast %c7_i32_119 : i32 to vector<1x128xi32>
      %259 = arith.cmpi eq, %184, %258 : vector<1x128xi32>
      %260 = vector.shape_cast %149 : vector<1x1xf32> to vector<1x1xf32>
      %261 = vector.broadcast %260 : vector<1x1xf32> to vector<1x128xf32>
      %262 = arith.select %259, %261, %252 : vector<1x128xi1>, vector<1x128xf32>
      %c8_i32 = arith.constant 8 : i32
      %263 = vector.broadcast %c8_i32 : i32 to vector<1x128xi32>
      %264 = arith.cmpi slt, %184, %263 : vector<1x128xi32>
      %cst_120 = arith.constant -1.000000e+30 : f32
      %265 = vector.broadcast %cst_120 : f32 to vector<1x128xf32>
      %266 = arith.select %264, %257, %265 : vector<1x128xi1>, vector<1x128xf32>
      %267 = vector.shape_cast %266 : vector<1x128xf32> to vector<1x1x128xf32>
      %cst_121 = arith.constant dense<0xFF800000> : vector<1xf32>
      %268 = vector.multi_reduction <maximumf>, %267, %cst_121 [1, 2] : vector<1x1x128xf32> to vector<1xf32>
      %269 = vector.shape_cast %268 : vector<1xf32> to vector<1x1x1xf32>
      %270 = vector.extract %269[0, 0, 0] : f32 from vector<1x1x1xf32>
      %271 = vector.broadcast %270 : f32 to vector<1x128xf32>
      %272 = arith.subf %257, %271 : vector<1x128xf32>
      %273 = math.exp %272 : vector<1x128xf32>
      %cst_122 = arith.constant 0.000000e+00 : f32
      %274 = vector.broadcast %cst_122 : f32 to vector<1x128xf32>
      %275 = arith.select %264, %273, %274 : vector<1x128xi1>, vector<1x128xf32>
      %276 = vector.shape_cast %275 : vector<1x128xf32> to vector<1x1x128xf32>
      %cst_123 = arith.constant dense<0.000000e+00> : vector<1xf32>
      %277 = vector.multi_reduction <add>, %276, %cst_123 [1, 2] : vector<1x1x128xf32> to vector<1xf32>
      %278 = vector.shape_cast %277 : vector<1xf32> to vector<1x1x1xf32>
      %279 = vector.extract %278[0, 0, 0] : f32 from vector<1x1x1xf32>
      %280 = vector.broadcast %279 : f32 to vector<1x128xf32>
      %281 = arith.divf %275, %280 : vector<1x128xf32>
      %282 = arith.mulf %281, %262 : vector<1x128xf32>
      %283 = vector.shape_cast %282 : vector<1x128xf32> to vector<1x1x128xf32>
      %cst_124 = arith.constant dense<0.000000e+00> : vector<1xf32>
      %284 = vector.multi_reduction <add>, %283, %cst_124 [1, 2] : vector<1x1x128xf32> to vector<1xf32>
      %285 = vector.shape_cast %284 : vector<1xf32> to vector<1x1x1xf32>
      %286 = vector.extract %285[0, 0, 0] : f32 from vector<1x1x1xf32>
      %c0_125 = arith.constant 0 : index
      %287 = memref.load %arg6[%c0_125] : memref<1xf32, #tpu.memory_space<smem>>
      memref.store %286, %arg6[%c0_125] : memref<1xf32, #tpu.memory_space<smem>>
    } else {
    }
    return
  }
  func.func @transform_0(%arg0: i32, %arg1: i32) -> (i32, i32, i32) {
    %c0_i32 = arith.constant 0 : i32
    %c0_i32_0 = arith.constant 0 : i32
    return %arg1, %arg0, %c0_i32 : i32, i32, i32
  }
  func.func @transform_1(%arg0: i32, %arg1: i32) -> (i32, i32, i32) {
    %c0_i32 = arith.constant 0 : i32
    %c0_i32_0 = arith.constant 0 : i32
    return %arg1, %arg0, %c0_i32 : i32, i32, i32
  }
  func.func @transform_2(%arg0: i32, %arg1: i32) -> (i32, i32, i32) {
    %c0_i32 = arith.constant 0 : i32
    %c0_i32_0 = arith.constant 0 : i32
    return %arg1, %arg0, %c0_i32 : i32, i32, i32
  }
  func.func @transform_3(%arg0: i32, %arg1: i32) -> (i32, i32, i32) {
    %c0_i32 = arith.constant 0 : i32
    %c0_i32_0 = arith.constant 0 : i32
    return %arg1, %arg0, %c0_i32 : i32, i32, i32
  }
  func.func @transform_4(%arg0: i32, %arg1: i32) -> i32 {
    %c0_i32 = arith.constant 0 : i32
    %c0_i32_0 = arith.constant 0 : i32
    return %c0_i32 : i32
  }
}

</mosaic_0001>

<llo_original>
// kernel: tpu_custom_call.1
$region0: #{tpu_custom_call.1}
  #allocation0 [shape = 'u32[]', space=smem, size = 0x4, offset = 0x4, fixed_abs, tag = 'smem constant byte address 0x4 - core index']
  #allocation1 [shape = 'u32[72,128]{1,0:T(1,128)}', space=vmem, size = 0x9000, scoped, tag = 'internal scratch']
  #allocation2 [shape = 'f32[1,1]{1,0:T(1,128)}', space=vmem, size = 0x200, scoped, tag = 'scratch operand']
  #allocation3 [shape = 'f32[1,1]{1,0:T(1,128)}', space=vmem, size = 0x200, scoped, tag = 'scratch operand']
  #allocation4 [shape = 'f32[1,1]{1,0:T(1,128)}', space=vmem, size = 0x200, scoped, tag = 'scratch operand']
  #allocation5 [shape = 'f32[1,1]{1,0:T(1,128)}', space=vmem, size = 0x200, scoped, tag = 'scratch operand']
  #allocation6 [shape = 'f32[1,1]{1,0:T(1,128)}', space=vmem, size = 0x200, scoped, tag = 'scratch operand']
  #allocation7 [shape = 'f32[1,1]{1,0:T(1,128)}', space=vmem, size = 0x200, scoped, tag = 'scratch operand']
  #allocation8 [shape = 'f32[2,32]{1,0:T(2,128)}', space=vmem, size = 0x400, scoped, tag = 'scratch operand']
  #allocation9 [shape = 'f32[2,16]{1,0:T(2,128)}', space=vmem, size = 0x400, scoped, tag = 'scratch operand']
  #allocation10 [shape = 'f32[2,32]{1,0:T(2,128)}', space=vmem, size = 0x400, scoped, tag = 'scratch operand']
  #allocation11 [shape = 'f32[2,16]{1,0:T(2,128)}', space=vmem, size = 0x400, scoped, tag = 'scratch operand']
  %s0 = inlined_call_operand.hbm [shape: f32[2,2,32], index: 0, kind: input, shape index: {}]
  %s1 = inlined_call_operand.hbm [shape: f32[2,2,32], index: 1, kind: input, shape index: {}]
  %s2 = inlined_call_operand.hbm [shape: f32[2,2,16], index: 2, kind: input, shape index: {}]
  %s3 = inlined_call_operand.hbm [shape: f32[2,2,16], index: 3, kind: input, shape index: {}]
  %s4 = inlined_call_operand.hbm [shape: f32[1], index: 4, kind: output, shape index: {}]
  %s5 = sld [smem:[#allocation0]]
  $region81: #{tpu_custom_call.1} parent=0
    _
  %s7 = ssub.s32 1, %s5
  %s8 = scalar_select 0, %s7, %s5
  $region1: #{tpu_custom_call.1} parent=0
    #allocation12 [shape = 'u8[2048]{0}', space=vmem, size = 0x800, scoped, tag = 'input window, operand 0']
    #allocation13 [shape = 's32[2]{0}', space=sflag, size = 0x8, scoped, tag = 'scoped memory for tpu_custom_call.1']
    #allocation14 [shape = 's32[2]{0}', space=sflag, size = 0x8, scoped, tag = 'scoped memory for tpu_custom_call.1']
    #allocation15 [shape = 'u8[2048]{0}', space=vmem, size = 0x800, scoped, tag = 'input window, operand 1']
    #allocation16 [shape = 's32[2]{0}', space=sflag, size = 0x8, scoped, tag = 'scoped memory for tpu_custom_call.1']
    #allocation17 [shape = 'u8[2048]{0}', space=vmem, size = 0x800, scoped, tag = 'input window, operand 2']
    #allocation18 [shape = 'u8[2048]{0}', space=vmem, size = 0x800, scoped, tag = 'input window, operand 3']
    #allocation19 [shape = 's32[2]{0}', space=sflag, size = 0x8, scoped, tag = 'scoped memory for tpu_custom_call.1']
    #allocation20 [shape = 'u8[512]{0}', space=smem, size = 0x200, scoped, tag = 'output window, operand 0, single buffered']
    %9 = vsyncpa [#allocation13], 0
    %s10 = scalar_lea.sflag [#allocation13], 1
    %11 = vsyncpa %s10, 0
    %12 = vsyncpa [#allocation16], 0
    %s13 = scalar_lea.sflag [#allocation16], 1
    %14 = vsyncpa %s13, 0
    %15 = vsyncpa [#allocation19], 0
    %s16 = scalar_lea.sflag [#allocation19], 1
    %17 = vsyncpa %s16, 0
    %18 = vsyncpa [#allocation14], 0
    loop: start=0, step=1, limit=4
    $region2: #{tpu_custom_call.1} parent=1 // loop_pre_header
      _
    $region3: #{tpu_custom_call.1} parent=1 // loop_header
      %s20 = sphi 0, %s24
      %p21 = scmp.ge.s32.totalorder %s20, 4
      %s27 = sphi 0, %s39
      %s28 = sphi 0, %s35
      %s29 = sphi 0, %s27
      %s30 = sphi 0, %s28
      %s31 = sphi 0, %s29
      %s32 = sphi 0, %s30
      %s44 = sphi 0, %s46
      %s47 = sphi 0, %s44
      %s48 = sphi 0, %s47
      %s64 = sphi 0, %s48
      %s72 = sphi 0, %s74
      %s75 = sphi 0, %s72
      %s76 = sphi 0, %s75
      %s92 = sphi 0, %s76
      %s100 = sphi 0, %s102
      %s103 = sphi 0, %s100
      %s104 = sphi 0, %s103
      %s120 = sphi 0, %s104
      %s128 = sphi 0, %s130
      %s131 = sphi 0, %s128
      %s132 = sphi 0, %s131
      %s148 = sphi 0, %s132
      %s152 = sphi 0, %s152
      %s154 = sphi 0, %s152
      %s155 = sphi 0, %s154
      %s169 = sphi 0, %s155
    $region4: #{tpu_custom_call.1} parent=1 // loop_header_branch
      %23 = sbr.rel (%p21) target = $region8
    $region5: #{tpu_custom_call.1} parent=1 // loop_body
      %s25 = ssub.s32 %s20, 1
      %s26 = ssub.s32 %s20, 2
      %s33 = sadd.s32 1, %s28
      %p34 = scmp.ge.s32.totalorder %s33, 2
      %s35 = scalar_select %p34, 0, %s33
      %s36 = sadd.s32 1, %s27
      %s37 = scalar_select %p34, %s36, %s27
      %p38 = scmp.ge.s32.totalorder %s37, 1
      %s39 = scalar_select %p38, 0, %s37
      %s40 = ssub.s32 %s28, %s35
      %s41 = ssub.s32 %s27, %s39
      %s42 = sor.u32 %s40, %s41
      %p43 = scmp.eq.s32.totalorder %s42, 0
      %s45 = sadd.s32 %s44, 1
      %s46 = scalar_select %p43, %s44, %s45
      %p49 = pneg %p43
      %p50 = scmp.eq.s32.totalorder %s20, 1
      %p51 = por %p49, %p50
      %p52 = scmp.ne.s32.totalorder %s44, %s47
      %p53 = scmp.eq.s32.totalorder %s20, 0
      %p54 = por %p52, %p53
      %p55 = scmp.ne.s32.totalorder %s44, %s47
      %p56 = scmp.eq.s32.totalorder %s25, 1
      %p57 = por %p55, %p56
      %p58 = scmp.ne.s32.totalorder %s47, %s48
      %p59 = scmp.eq.s32.totalorder %s25, 0
      %p60 = por %p58, %p59
      %p61 = scmp.ne.s32.totalorder %s47, %s48
      %p62 = scmp.eq.s32.totalorder %s26, 1
      %p63 = por %p61, %p62
      %p65 = scmp.ne.s32.totalorder %s48, %s64
      %p66 = scmp.eq.s32.totalorder %s26, 0
      %p67 = por %p65, %p66
      %s68 = ssub.s32 %s28, %s35
      %s69 = ssub.s32 %s27, %s39
      %s70 = sor.u32 %s68, %s69
      %p71 = scmp.eq.s32.totalorder %s70, 0
      %s73 = sadd.s32 %s72, 1
      %s74 = scalar_select %p71, %s72, %s73
      %p77 = pneg %p71
      %p78 = scmp.eq.s32.totalorder %s20, 1
      %p79 = por %p77, %p78
      %p80 = scmp.ne.s32.totalorder %s72, %s75
      %p81 = scmp.eq.s32.totalorder %s20, 0
      %p82 = por %p80, %p81
      %p83 = scmp.ne.s32.totalorder %s72, %s75
      %p84 = scmp.eq.s32.totalorder %s25, 1
      %p85 = por %p83, %p84
      %p86 = scmp.ne.s32.totalorder %s75, %s76
      %p87 = scmp.eq.s32.totalorder %s25, 0
      %p88 = por %p86, %p87
      %p89 = scmp.ne.s32.totalorder %s75, %s76
      %p90 = scmp.eq.s32.totalorder %s26, 1
      %p91 = por %p89, %p90
      %p93 = scmp.ne.s32.totalorder %s76, %s92
      %p94 = scmp.eq.s32.totalorder %s26, 0
      %p95 = por %p93, %p94
      %s96 = ssub.s32 %s28, %s35
      %s97 = ssub.s32 %s27, %s39
      %s98 = sor.u32 %s96, %s97
      %p99 = scmp.eq.s32.totalorder %s98, 0
      %s101 = sadd.s32 %s100, 1
      %s102 = scalar_select %p99, %s100, %s101
      %p105 = pneg %p99
      %p106 = scmp.eq.s32.totalorder %s20, 1
      %p107 = por %p105, %p106
      %p108 = scmp.ne.s32.totalorder %s100, %s103
      %p109 = scmp.eq.s32.totalorder %s20, 0
      %p110 = por %p108, %p109
      %p111 = scmp.ne.s32.totalorder %s100, %s103
      %p112 = scmp.eq.s32.totalorder %s25, 1
      %p113 = por %p111, %p112
      %p114 = scmp.ne.s32.totalorder %s103, %s104
      %p115 = scmp.eq.s32.totalorder %s25, 0
      %p116 = por %p114, %p115
      %p117 = scmp.ne.s32.totalorder %s103, %s104
      %p118 = scmp.eq.s32.totalorder %s26, 1
      %p119 = por %p117, %p118
      %p121 = scmp.ne.s32.totalorder %s104, %s120
      %p122 = scmp.eq.s32.totalorder %s26, 0
      %p123 = por %p121, %p122
      %s124 = ssub.s32 %s28, %s35
      %s125 = ssub.s32 %s27, %s39
      %s126 = sor.u32 %s124, %s125
      %p127 = scmp.eq.s32.totalorder %s126, 0
      %s129 = sadd.s32 %s128, 1
      %s130 = scalar_select %p127, %s128, %s129
      %p133 = pneg %p127
      %p134 = scmp.eq.s32.totalorder %s20, 1
      %p135 = por %p133, %p134
      %p136 = scmp.ne.s32.totalorder %s128, %s131
      %p137 = scmp.eq.s32.totalorder %s20, 0
      %p138 = por %p136, %p137
      %p139 = scmp.ne.s32.totalorder %s128, %s131
      %p140 = scmp.eq.s32.totalorder %s25, 1
      %p141 = por %p139, %p140
      %p142 = scmp.ne.s32.totalorder %s131, %s132
      %p143 = scmp.eq.s32.totalorder %s25, 0
      %p144 = por %p142, %p143
      %p145 = scmp.ne.s32.totalorder %s131, %s132
      %p146 = scmp.eq.s32.totalorder %s26, 1
      %p147 = por %p145, %p146
      %p149 = scmp.ne.s32.totalorder %s132, %s148
      %p150 = scmp.eq.s32.totalorder %s26, 0
      %p151 = por %p149, %p150
      %s153 = sadd.s32 %s152, 1
      %p156 = scmp.eq.s32.totalorder %s20, 1
      %p157 = scmp.ne.s32.totalorder %s152, %s154
      %p158 = scmp.eq.s32.totalorder %s20, 0
      %p159 = por %p157, %p158
      %p160 = scmp.ne.s32.totalorder %s152, %s154
      %p161 = scmp.eq.s32.totalorder %s25, 1
      %p162 = por %p160, %p161
      %p163 = scmp.ne.s32.totalorder %s154, %s155
      %p164 = scmp.eq.s32.totalorder %s25, 0
      %p165 = por %p163, %p164
      %p166 = scmp.ne.s32.totalorder %s154, %s155
      %p167 = scmp.eq.s32.totalorder %s26, 1
      %p168 = por %p166, %p167
      %p170 = scmp.ne.s32.totalorder %s155, %s169
      %p171 = scmp.eq.s32.totalorder %s26, 0
      %p172 = por %p170, %p171
      %p173 = scmp.le.s32.totalorder 1, %s20
      %p174 = scmp.lt.s32.totalorder %s20, 3
      %p175 = pnand %p173, %p174
      %p176 = pneg %p175
      // Predicated region
      $region9: #{tpu_custom_call.1} parent=5 // pred_check
        _
      $region10: #{tpu_custom_call.1} parent=5 // pred_check_branch
        %178 = sbr.rel (%p175) target = $region12
      $region11: #{tpu_custom_call.1} parent=5 // pred_region
        %s179 = ssub.s32 %s20, 1
      $region12: #{tpu_custom_call.1} parent=5 // pred_fallthru
        _
      %p180 = scmp.lt.s32.totalorder %s20, 2
      // Predicated region
      $region13: #{tpu_custom_call.1} parent=5 // pred_check
        %p181 = pneg %p180
      $region14: #{tpu_custom_call.1} parent=5 // pred_check_branch
        %183 = sbr.rel (%p181) target = $region16
      $region15: #{tpu_custom_call.1} parent=5 // pred_region
        // Predicated region
        $region17: #{tpu_custom_call.1} parent=15 // pred_check
          %p184 = pneg %p54
        $region18: #{tpu_custom_call.1} parent=15 // pred_check_branch
          %186 = sbr.rel (%p184) target = $region20
        $region19: #{tpu_custom_call.1} parent=15 // pred_region
          %s187 = sand.u32 %s44, 1
          %s188 = scalar_lea.sflag [#allocation13], %s187
          %s189 = sand.u32 %s44, 1
          %s190 = smul.addr %s189, 2
          %s191 = scalar_lea.vmem [#allocation12], %s190
          %193 = vsyncadd %s188, 0
          %s194 = sadd.s32 %s27, %s28
          %s195 = smul.addr %s194, 2
          %s196 = scalar_lea.hbm %s0, %s195
          %s198 = sshll.u32 %s196, 4
          %s199 = int_to_ptr.hbm [resolvable:$true] %s198
          %s200 = sshll.u32 %s191, 4
          %s201 = int_to_ptr.vmem [resolvable:$true] %s200
          %203 = dma.hbm_to_vmem [thread:$0]  %s199, 32, %s201, %s188
        $region20: #{tpu_custom_call.1} parent=15 // pred_fallthru
          _
        // Predicated region
        $region21: #{tpu_custom_call.1} parent=15 // pred_check
          %p204 = pneg %p82
        $region22: #{tpu_custom_call.1} parent=15 // pred_check_branch
          %206 = sbr.rel (%p204) target = $region24
        $region23: #{tpu_custom_call.1} parent=15 // pred_region
          %s207 = sand.u32 %s20, 1
          %s208 = scalar_lea.sflag [#allocation16], %s207
          %s209 = sand.u32 %s72, 1
          %s210 = smul.addr %s209, 2
          %s211 = scalar_lea.vmem [#allocation15], %s210
          %213 = vsyncadd %s208, 0
          %s214 = sadd.s32 %s27, %s28
          %s215 = smul.addr %s214, 2
          %s216 = scalar_lea.hbm %s1, %s215
          %s218 = sshll.u32 %s216, 4
          %s219 = int_to_ptr.hbm [resolvable:$true] %s218
          %s220 = sshll.u32 %s211, 4
          %s221 = int_to_ptr.vmem [resolvable:$true] %s220
          %223 = dma.hbm_to_vmem [thread:$0]  %s219, 32, %s221, %s208
        $region24: #{tpu_custom_call.1} parent=15 // pred_fallthru
          _
        // Predicated region
        $region25: #{tpu_custom_call.1} parent=15 // pred_check
          %p224 = pneg %p110
        $region26: #{tpu_custom_call.1} parent=15 // pred_check_branch
          %226 = sbr.rel (%p224) target = $region28
        $region27: #{tpu_custom_call.1} parent=15 // pred_region
          %s227 = sand.u32 %s20, 1
          %s228 = scalar_lea.sflag [#allocation16], %s227
          %s229 = sand.u32 %s100, 1
          %s230 = smul.addr %s229, 2
          %s231 = scalar_lea.vmem [#allocation17], %s230
          %233 = vsyncadd %s228, 0
          %s234 = sadd.s32 %s27, %s28
          %s235 = smul.addr %s234, 2
          %s236 = scalar_lea.hbm %s2, %s235
          %s238 = sshll.u32 %s236, 4
          %s239 = int_to_ptr.hbm [resolvable:$true] %s238
          %s240 = sshll.u32 %s231, 4
          %s241 = int_to_ptr.vmem [resolvable:$true] %s240
          %243 = dma.hbm_to_vmem [thread:$0]  %s239, 32, %s241, %s228
        $region28: #{tpu_custom_call.1} parent=15 // pred_fallthru
          _
        // Predicated region
        $region29: #{tpu_custom_call.1} parent=15 // pred_check
          %p244 = pneg %p138
        $region30: #{tpu_custom_call.1} parent=15 // pred_check_branch
          %246 = sbr.rel (%p244) target = $region32
        $region31: #{tpu_custom_call.1} parent=15 // pred_region
          %s247 = sand.u32 %s128, 1
          %s248 = scalar_lea.sflag [#allocation19], %s247
          %s249 = sand.u32 %s128, 1
          %s250 = smul.addr %s249, 2
          %s251 = scalar_lea.vmem [#allocation18], %s250
          %253 = vsyncadd %s248, 0
          %s254 = sadd.s32 %s27, %s28
          %s255 = smul.addr %s254, 2
          %s256 = scalar_lea.hbm %s3, %s255
          %s258 = sshll.u32 %s256, 4
          %s259 = int_to_ptr.hbm [resolvable:$true] %s258
          %s260 = sshll.u32 %s251, 4
          %s261 = int_to_ptr.vmem [resolvable:$true] %s260
          %263 = dma.hbm_to_vmem [thread:$0]  %s259, 32, %s261, %s248
        $region32: #{tpu_custom_call.1} parent=15 // pred_fallthru
          _
      $region16: #{tpu_custom_call.1} parent=5 // pred_fallthru
        _
      %p264 = scmp.le.s32.totalorder 1, %s20
      %p265 = scmp.lt.s32.totalorder %s20, 3
      %p266 = pnand %p264, %p265
      %p267 = pneg %p266
      // Predicated region
      $region33: #{tpu_custom_call.1} parent=5 // pred_check
        _
      $region34: #{tpu_custom_call.1} parent=5 // pred_check_branch
        %269 = sbr.rel (%p266) target = $region36
      $region35: #{tpu_custom_call.1} parent=5 // pred_region
        %s270 = ssub.s32 %s20, 1
        %s271 = sand.u32 %s47, 1
        %s272 = scalar_lea.sflag [#allocation13], %s271
        %s273 = sand.u32 %s47, 1
        %s274 = smul.addr %s273, 2
        %s275 = scalar_lea.vmem [#allocation12], %s274
        // Predicated region
        $region37: #{tpu_custom_call.1} parent=35 // pred_check
          %p276 = pneg %p60
        $region38: #{tpu_custom_call.1} parent=35 // pred_check_branch
          %278 = sbr.rel (%p276) target = $region40
        $region39: #{tpu_custom_call.1} parent=35 // pred_region
          %280 = dma.done %s272, 32
        $region40: #{tpu_custom_call.1} parent=35 // pred_fallthru
          _
        %s281 = sand.u32 %s25, 1
        %s282 = scalar_lea.sflag [#allocation16], %s281
        %s283 = sand.u32 %s75, 1
        %s284 = smul.addr %s283, 2
        %s285 = scalar_lea.vmem [#allocation15], %s284
        // Predicated region
        $region41: #{tpu_custom_call.1} parent=35 // pred_check
          %p286 = pneg %p88
        $region42: #{tpu_custom_call.1} parent=35 // pred_check_branch
          %288 = sbr.rel (%p286) target = $region44
        $region43: #{tpu_custom_call.1} parent=35 // pred_region
          %290 = dma.done %s282, 32
        $region44: #{tpu_custom_call.1} parent=35 // pred_fallthru
          _
        %s291 = sand.u32 %s25, 1
        %s292 = scalar_lea.sflag [#allocation16], %s291
        %s293 = sand.u32 %s103, 1
        %s294 = smul.addr %s293, 2
        %s295 = scalar_lea.vmem [#allocation17], %s294
        // Predicated region
        $region45: #{tpu_custom_call.1} parent=35 // pred_check
          %p296 = pneg %p116
        $region46: #{tpu_custom_call.1} parent=35 // pred_check_branch
          %298 = sbr.rel (%p296) target = $region48
        $region47: #{tpu_custom_call.1} parent=35 // pred_region
          %300 = dma.done %s292, 32
        $region48: #{tpu_custom_call.1} parent=35 // pred_fallthru
          _
        %s301 = sand.u32 %s131, 1
        %s302 = scalar_lea.sflag [#allocation19], %s301
        %s303 = sand.u32 %s131, 1
        %s304 = smul.addr %s303, 2
        %s305 = scalar_lea.vmem [#allocation18], %s304
        // Predicated region
        $region49: #{tpu_custom_call.1} parent=35 // pred_check
          %p306 = pneg %p144
        $region50: #{tpu_custom_call.1} parent=35 // pred_check_branch
          %308 = sbr.rel (%p306) target = $region52
        $region51: #{tpu_custom_call.1} parent=35 // pred_region
          %310 = dma.done %s302, 32
        $region52: #{tpu_custom_call.1} parent=35 // pred_fallthru
          _
        %s311 = sand.u32 %s47, 1
        %s312 = scalar_lea.sflag [#allocation13], %s311
        %s313 = sand.u32 %s47, 1
        %s314 = smul.addr %s313, 2
        %s315 = scalar_lea.vmem [#allocation12], %s314
        %p316 = pneg %p60
        %p317 = pneg %p57
        %s318 = sand.u32 %s25, 1
        %s319 = scalar_lea.sflag [#allocation16], %s318
        %s320 = sand.u32 %s75, 1
        %s321 = smul.addr %s320, 2
        %s322 = scalar_lea.vmem [#allocation15], %s321
        %p323 = pneg %p88
        %p324 = pneg %p85
        %s325 = sand.u32 %s25, 1
        %s326 = scalar_lea.sflag [#allocation16], %s325
        %s327 = sand.u32 %s103, 1
        %s328 = smul.addr %s327, 2
        %s329 = scalar_lea.vmem [#allocation17], %s328
        %p330 = pneg %p116
        %p331 = pneg %p113
        %s332 = sand.u32 %s131, 1
        %s333 = scalar_lea.sflag [#allocation19], %s332
        %s334 = sand.u32 %s131, 1
        %s335 = smul.addr %s334, 2
        %s336 = scalar_lea.vmem [#allocation18], %s335
        %p337 = pneg %p144
        %p338 = pneg %p141
        %p339 = pneg %p165
        %p340 = pneg %p162
        %p341 = scmp.eq.s32.totalorder %s29, 0
        %p342 = scmp.eq.s32.totalorder %s30, 0
        %p343 = pnand %p341, %p342
        %p344 = pneg %p343
        // Predicated region
        $region53: #{tpu_custom_call.1} parent=35 // pred_check
          _
        $region54: #{tpu_custom_call.1} parent=35 // pred_check_branch
          %346 = sbr.rel (%p343) target = $region56
        $region55: #{tpu_custom_call.1} parent=35 // pred_region
          %vm347 = vcmask 0
          %348 = vst.msk [vmem:[#allocation2] sm:$0x1] %vm347, 0.0
          %349 = vst.msk [vmem:[#allocation3] sm:$0x1] %vm347, 0.0
          %350 = vst.msk [vmem:[#allocation4] sm:$0x1] %vm347, 0.0
          %351 = vst.msk [vmem:[#allocation5] sm:$0x1] %vm347, 0.0
          %352 = vst.msk [vmem:[#allocation6] sm:$0x1] %vm347, 0.0
          %353 = vst.msk [vmem:[#allocation7] sm:$0x1] %vm347, 0.0
          %vm354 = vcmask 254976
          %355 = vst.msk [vmem:[#allocation8] sm:$0x3] %vm354, 0.0
          %vm356 = vcmask 123904
          %357 = vst.msk [vmem:[#allocation9] sm:$0x3] %vm356, 0.0
        $region56: #{tpu_custom_call.1} parent=35 // pred_fallthru
          _
        // Predicated region
        $region57: #{tpu_custom_call.1} parent=35 // pred_check
          %p358 = pneg %p342
        $region58: #{tpu_custom_call.1} parent=35 // pred_check_branch
          %360 = sbr.rel (%p358) target = $region60
        $region59: #{tpu_custom_call.1} parent=35 // pred_region
          %vm361 = vcmask 254976
          %362 = vst.msk [vmem:[#allocation10] sm:$0x3] %vm361, 0.0
          %vm363 = vcmask 123904
          %364 = vst.msk [vmem:[#allocation11] sm:$0x3] %vm363, 0.0
        $region60: #{tpu_custom_call.1} parent=35 // pred_fallthru
          _
        %v365 = vld [vmem:[%s275] sm:$0x3]
        %v366 = vld [vmem:[%s285] sm:$0x3]
        %v367 = vsub.f32 %v365, %v366
        %v368 = vld [vmem:[%s295] sm:$0x3]
        %v369 = vld [vmem:[%s305] sm:$0x3]
        %v370 = vsub.f32 %v368, %v369
        %v371 = vand.u32 2147483647, %v367
        %vm372 = vcmp.lt.f32.partialorder %v371, 1.0
        %v373 = vmul.f32 %v367, 0.5
        %v374 = vmul.f32 %v373, %v367
        %v375 = vsub.f32 %v371, 0.5
        %v376 = vsel %vm372, %v374, %v375
        %v377 = vand.u32 2147483647, %v370
        %vm378 = vcmp.lt.f32.partialorder %v377, 1.0
        %v379 = vmul.f32 %v370, 0.5
        %v380 = vmul.f32 %v379, %v370
        %v381 = vsub.f32 %v377, 0.5
        %v382 = vsel %vm378, %v380, %v381
        %v383 = vld [vmem:[#allocation2] sm:$0x1]
        %vm384 = vcmask 254976
        %v385 = vsel %vm384, %v376, 0.0
        %386 = vadd.xlane.f32.xlu0 %v385
        %v387 = vpop.xlane.xlu0 %386
        %v388 = vrot.slane %v387, 4
        %v389 = vadd.f32 %v387, %v388
        %v390 = vrot.slane %v389, 2
        %v391 = vadd.f32 %v389, %v390
        %v392 = vrot.slane %v391, 1
        %v393 = vadd.f32 %v391, %v392
        %s394 = vtos %v393
        %v395 = vstv %s394
        %v396 = vadd.f32 %v383, %v395
        %vm397 = vcmask 0
        %398 = vst.msk [vmem:[#allocation2] sm:$0x1] %vm397, %v396
        %v399 = vld [vmem:[#allocation3] sm:$0x1]
        %vm400 = vcmask 123904
        %v401 = vsel %vm400, %v382, 0.0
        %402 = vadd.xlane.f32.xlu0 %v401
        %v403 = vpop.xlane.xlu0 %402
        %v404 = vrot.slane %v403, 4
        %v405 = vadd.f32 %v403, %v404
        %v406 = vrot.slane %v405, 2
        %v407 = vadd.f32 %v405, %v406
        %v408 = vrot.slane %v407, 1
        %v409 = vadd.f32 %v407, %v408
        %s410 = vtos %v409
        %v411 = vstv %s410
        %v412 = vadd.f32 %v399, %v411
        %413 = vst.msk [vmem:[#allocation3] sm:$0x1] %vm397, %v412
        %v414 = vld [vmem:[#allocation4] sm:$0x1]
        %v415 = vsel %vm384, %v367, 0.0
        %416 = vadd.xlane.f32.xlu0 %v415
        %v417 = vpop.xlane.xlu0 %416
        %v418 = vrcp.pop 32.0
        %v419 = vmul.f32 32.0, %v418
        %v420 = vsub.f32 1.0, %v419
        %v421 = vmul.f32 %v418, %v420
        %v422 = vadd.f32 %v418, %v421
        %vm423 = vweird.f32 %v418
        %v424 = vsel %vm423, %v418, %v422
        %v425 = vmul.f32 %v417, %v424
        %v426 = vand.u32 2147483647, %v425
        %vm427 = vcmp.lt.f32.partialorder %v426, 1.0
        %v428 = vmul.f32 %v425, 0.5
        %v429 = vmul.f32 %v428, %v425
        %v430 = vsub.f32 %v426, 0.5
        %v431 = vsel %vm427, %v429, %v430
        %vm432 = vcmask 1024
        %v433 = vsel %vm432, %v431, 0.0
        %434 = vadd.xlane.f32.xlu0 %v433
        %v435 = vpop.xlane.xlu0 %434
        %v436 = vrot.slane %v435, 4
        %v437 = vadd.f32 %v435, %v436
        %v438 = vrot.slane %v437, 2
        %v439 = vadd.f32 %v437, %v438
        %v440 = vrot.slane %v439, 1
        %v441 = vadd.f32 %v439, %v440
        %s442 = vtos %v441
        %v443 = vstv %s442
        %v444 = vadd.f32 %v414, %v443
        %445 = vst.msk [vmem:[#allocation4] sm:$0x1] %vm397, %v444
        %v446 = vld [vmem:[#allocation5] sm:$0x1]
        %v447 = vsel %vm400, %v370, 0.0
        %448 = vadd.xlane.f32.xlu0 %v447
        %v449 = vpop.xlane.xlu0 %448
        %v450 = vrcp.pop 16.0
        %v451 = vmul.f32 16.0, %v450
        %v452 = vsub.f32 1.0, %v451
        %v453 = vmul.f32 %v450, %v452
        %v454 = vadd.f32 %v450, %v453
        %vm455 = vweird.f32 %v450
        %v456 = vsel %vm455, %v450, %v454
        %v457 = vmul.f32 %v449, %v456
        %v458 = vand.u32 2147483647, %v457
        %vm459 = vcmp.lt.f32.partialorder %v458, 1.0
        %v460 = vmul.f32 %v457, 0.5
        %v461 = vmul.f32 %v460, %v457
        %v462 = vsub.f32 %v458, 0.5
        %v463 = vsel %vm459, %v461, %v462
        %v464 = vsel %vm432, %v463, 0.0
        %465 = vadd.xlane.f32.xlu0 %v464
        %v466 = vpop.xlane.xlu0 %465
        %v467 = vrot.slane %v466, 4
        %v468 = vadd.f32 %v466, %v467
        %v469 = vrot.slane %v468, 2
        %v470 = vadd.f32 %v468, %v469
        %v471 = vrot.slane %v470, 1
        %v472 = vadd.f32 %v470, %v471
        %s473 = vtos %v472
        %v474 = vstv %s473
        %v475 = vadd.f32 %v446, %v474
        %476 = vst.msk [vmem:[#allocation5] sm:$0x1] %vm397, %v475
        %v477 = vrot.slane %v415, 4
        %v478 = vadd.f32 %v415, %v477
        %v479 = vrot.slane %v478, 2
        %v480 = vadd.f32 %v478, %v479
        %v481 = vrot.slane %v480, 1
        %v482 = vadd.f32 %v480, %v481
        %v483 = vrot.slane %v447, 4
        %v484 = vadd.f32 %v447, %v483
        %v485 = vrot.slane %v484, 2
        %v486 = vadd.f32 %v484, %v485
        %v487 = vrot.slane %v486, 1
        %v488 = vadd.f32 %v486, %v487
        %v489 = vlaneseq
        %v490 = vshrl.u32 %v489, 7
        %v491 = vld [vmem:[#allocation8] sm:$0x3]
        %v492 = vstv %s30
        %vm493 = vcmp.eq.s32.totalorder %v490, %v492
        %v494 = vsel %vm493, %v482, 0.0
        %v495 = vadd.f32 %v491, %v494
        %496 = vst.msk [vmem:[#allocation8] sm:$0x3] %vm384, %v495
        %v497 = vld [vmem:[#allocation9] sm:$0x3]
        %v498 = vsel %vm493, %v488, 0.0
        %v499 = vadd.f32 %v497, %v498
        %500 = vst.msk [vmem:[#allocation9] sm:$0x3] %vm400, %v499
        %v501 = vld [vmem:[#allocation10] sm:$0x3]
        %v502 = vadd.f32 %v501, %v367
        %503 = vst.msk [vmem:[#allocation10] sm:$0x3] %vm384, %v502
        %v504 = vld [vmem:[#allocation11] sm:$0x3]
        %v505 = vadd.f32 %v504, %v370
        %506 = vst.msk [vmem:[#allocation11] sm:$0x3] %vm400, %v505
        %p507 = scmp.eq.s32.totalorder %s30, 1
        // Predicated region
        $region61: #{tpu_custom_call.1} parent=35 // pred_check
          %p508 = pneg %p507
        $region62: #{tpu_custom_call.1} parent=35 // pred_check_branch
          %510 = sbr.rel (%p508) target = $region64
        $region63: #{tpu_custom_call.1} parent=35 // pred_region
          %v511 = vld [vmem:[#allocation6] sm:$0x1]
          %v512 = vld [vmem:[#allocation10] sm:$0x3]
          %v513 = vmul.f32 %v512, 0.5
          %v514 = vand.u32 2147483647, %v513
          %vm515 = vcmp.lt.f32.partialorder %v514, 1.0
          %v516 = vmul.f32 %v513, 0.5
          %v517 = vmul.f32 %v516, %v513
          %v518 = vsub.f32 %v514, 0.5
          %v519 = vsel %vm515, %v517, %v518
          %v520 = vsel %vm384, %v519, 0.0
          %521 = vadd.xlane.f32.xlu0 %v520
          %v522 = vpop.xlane.xlu0 %521
          %v523 = vrot.slane %v522, 4
          %v524 = vadd.f32 %v522, %v523
          %v525 = vrot.slane %v524, 2
          %v526 = vadd.f32 %v524, %v525
          %v527 = vrot.slane %v526, 1
          %v528 = vadd.f32 %v526, %v527
          %s529 = vtos %v528
          %v530 = vstv %s529
          %v531 = vadd.f32 %v511, %v530
          %532 = vst.msk [vmem:[#allocation6] sm:$0x1] %vm397, %v531
          %v533 = vld [vmem:[#allocation7] sm:$0x1]
          %v534 = vld [vmem:[#allocation11] sm:$0x3]
          %v535 = vmul.f32 %v534, 0.5
          %v536 = vand.u32 2147483647, %v535
          %vm537 = vcmp.lt.f32.partialorder %v536, 1.0
          %v538 = vmul.f32 %v535, 0.5
          %v539 = vmul.f32 %v538, %v535
          %v540 = vsub.f32 %v536, 0.5
          %v541 = vsel %vm537, %v539, %v540
          %v542 = vsel %vm400, %v541, 0.0
          %543 = vadd.xlane.f32.xlu0 %v542
          %v544 = vpop.xlane.xlu0 %543
          %v545 = vrot.slane %v544, 4
          %v546 = vadd.f32 %v544, %v545
          %v547 = vrot.slane %v546, 2
          %v548 = vadd.f32 %v546, %v547
          %v549 = vrot.slane %v548, 1
          %v550 = vadd.f32 %v548, %v549
          %s551 = vtos %v550
          %v552 = vstv %s551
          %v553 = vadd.f32 %v533, %v552
          %554 = vst.msk [vmem:[#allocation7] sm:$0x1] %vm397, %v553
        $region64: #{tpu_custom_call.1} parent=35 // pred_fallthru
          _
        %p555 = pnand %p341, %p507
        %p556 = pneg %p555
        // Predicated region
        $region65: #{tpu_custom_call.1} parent=35 // pred_check
          _
        $region66: #{tpu_custom_call.1} parent=35 // pred_check_branch
          %558 = sbr.rel (%p555) target = $region68
        $region67: #{tpu_custom_call.1} parent=35 // pred_region
          %v559 = vld [vmem:[#allocation2] sm:$0x1]
          %v560 = vmul.f32 %v559, 0.0078125
          %v561 = vld [vmem:[#allocation3] sm:$0x1]
          %v562 = vmul.f32 %v561, 0.015625
          %v563 = vld [vmem:[#allocation4] sm:$0x1]
          %v564 = vmul.f32 %v563, 0.5
          %v565 = vld [vmem:[#allocation5] sm:$0x1]
          %v566 = vmul.f32 %v565, 0.5
          %v567 = vld [vmem:[#allocation6] sm:$0x1]
          %v568 = vmul.f32 %v567, 0.015625
          %v569 = vld [vmem:[#allocation7] sm:$0x1]
          %v570 = vmul.f32 %v569, 0.03125
          %v571 = vld [vmem:[#allocation8] sm:$0x3]
          %v572 = vmul.f32 %v571, 0.5
          %v573 = vand.u32 2147483647, %v572
          %vm574 = vcmp.lt.f32.partialorder %v573, 1.0
          %v575 = vmul.f32 %v572, 0.5
          %v576 = vmul.f32 %v575, %v572
          %v577 = vsub.f32 %v573, 0.5
          %v578 = vsel %vm574, %v576, %v577
          %v579 = vsel %vm384, %v578, 0.0
          %580 = vadd.xlane.f32.xlu0 %v579
          %v581 = vpop.xlane.xlu0 %580
          %v582 = vrot.slane %v581, 4
          %v583 = vadd.f32 %v581, %v582
          %v584 = vrot.slane %v583, 2
          %v585 = vadd.f32 %v583, %v584
          %v586 = vrot.slane %v585, 1
          %v587 = vadd.f32 %v585, %v586
          %s588 = vtos %v587
          %s589 = smul.f32 %s588, 0.03125
          %v590 = vld [vmem:[#allocation9] sm:$0x3]
          %v591 = vmul.f32 %v590, 0.5
          %v592 = vand.u32 2147483647, %v591
          %vm593 = vcmp.lt.f32.partialorder %v592, 1.0
          %v594 = vmul.f32 %v591, 0.5
          %v595 = vmul.f32 %v594, %v591
          %v596 = vsub.f32 %v592, 0.5
          %v597 = vsel %vm593, %v595, %v596
          %v598 = vsel %vm400, %v597, 0.0
          %599 = vadd.xlane.f32.xlu0 %v598
          %v600 = vpop.xlane.xlu0 %599
          %v601 = vrot.slane %v600, 4
          %v602 = vadd.f32 %v600, %v601
          %v603 = vrot.slane %v602, 2
          %v604 = vadd.f32 %v602, %v603
          %v605 = vrot.slane %v604, 1
          %v606 = vadd.f32 %v604, %v605
          %s607 = vtos %v606
          %s608 = smul.f32 %s607, 0.0625
          %v609 = vlaneseq
          %v610 = vand.u32 %v609, 127
          %vm611 = vcmp.eq.s32.totalorder %v610, 0
          %613 = vset.pattern.permute.xlu0 0
          %614 = vperm.xlu0 %613, %v560
          %v615 = vpop.permute.xlu0 %614
          %v617 = vperm.slane %v615, 0
          %v618 = vsel %vm611, %v617, 0.0
          %vm619 = vcmp.eq.s32.totalorder %v610, 1
          %621 = vset.pattern.permute.xlu0 0
          %622 = vperm.xlu0 %621, %v562
          %v623 = vpop.permute.xlu0 %622
          %v625 = vperm.slane %v623, 0
          %v626 = vsel %vm619, %v625, %v618
          %vm627 = vcmp.eq.s32.totalorder %v610, 2
          %629 = vset.pattern.permute.xlu0 0
          %630 = vperm.xlu0 %629, %v564
          %v631 = vpop.permute.xlu0 %630
          %v633 = vperm.slane %v631, 0
          %v634 = vsel %vm627, %v633, %v626
          %vm635 = vcmp.eq.s32.totalorder %v610, 3
          %v636 = vstv %s589
          %v637 = vsel %vm635, %v636, %v634
          %vm638 = vcmp.eq.s32.totalorder %v610, 4
          %640 = vset.pattern.permute.xlu0 0
          %641 = vperm.xlu0 %640, %v568
          %v642 = vpop.permute.xlu0 %641
          %v644 = vperm.slane %v642, 0
          %v645 = vsel %vm638, %v644, %v637
          %vm646 = vcmp.eq.s32.totalorder %v610, 5
          %648 = vset.pattern.permute.xlu0 0
          %649 = vperm.xlu0 %648, %v566
          %v650 = vpop.permute.xlu0 %649
          %v652 = vperm.slane %v650, 0
          %v653 = vsel %vm646, %v652, %v645
          %vm654 = vcmp.eq.s32.totalorder %v610, 6
          %v655 = vstv %s608
          %v656 = vsel %vm654, %v655, %v653
          %vm657 = vcmp.eq.s32.totalorder %v610, 7
          %659 = vset.pattern.permute.xlu0 0
          %660 = vperm.xlu0 %659, %v570
          %v661 = vpop.permute.xlu0 %660
          %v663 = vperm.slane %v661, 0
          %v664 = vsel %vm657, %v663, %v656
          %vm665 = vcmp.lt.s32.totalorder %v610, 8
          %v666 = vsel %vm665, %v664, -1e+30
          %667 = vmax.xlane.f32.xlu0 %v666
          %v668 = vpop.xlane.xlu0 %667
          %s669 = vtos %v668
          %v670 = vstv %s669
          %v671 = vsub.f32 %v664, %v670
          %v672 = vmul.f32 %v671, 1.442695
          %v673 = vpow.pop %v672
          %v674 = vsel %vm665, %v673, 0.0
          %vm675 = vcmask 1040384
          %v676 = vsel %vm675, %v674, 0.0
          %677 = vadd.xlane.f32.xlu0 %v676
          %v678 = vpop.xlane.xlu0 %677
          %v679 = vrot.slane %v678, 4
          %v680 = vadd.f32 %v678, %v679
          %v681 = vrot.slane %v680, 2
          %v682 = vadd.f32 %v680, %v681
          %v683 = vrot.slane %v682, 1
          %v684 = vadd.f32 %v682, %v683
          %s685 = vtos %v684
          %v686 = vstv %s685
          %v687 = vrcp.pop %v686
          %v688 = vmul.f32 %v686, %v687
          %v689 = vsub.f32 1.0, %v688
          %v690 = vmul.f32 %v687, %v689
          %v691 = vadd.f32 %v687, %v690
          %vm692 = vweird.f32 %v686
          %vm693 = vweird.f32 %v687
          %vm694 = vmor %vm692, %vm693
          %v695 = vsel %vm694, %v687, %v691
          %v696 = vand.u32 2147483647, %v686
          %vm697 = vcmp.eq.f32.partialorder %v696, 8.507059e+37
          %v698 = vand.u32 %v686, 2147483648
          %v699 = vor.u32 1.1754944e-38, %v698
          %v700 = vsel %vm697, %v699, %v695
          %v701 = vmul.f32 %v674, %v700
          %v702 = vmul.f32 %v701, %v664
          %v703 = vsel %vm675, %v702, 0.0
          %704 = vadd.xlane.f32.xlu0 %v703
          %v705 = vpop.xlane.xlu0 %704
          %v706 = vrot.slane %v705, 4
          %v707 = vadd.f32 %v705, %v706
          %v708 = vrot.slane %v707, 2
          %v709 = vadd.f32 %v707, %v708
          %v710 = vrot.slane %v709, 1
          %v711 = vadd.f32 %v709, %v710
          %s712 = vtos %v711
          %s713 = scalar_lea.smem [#allocation20], 0
          %714 = sst [smem:[%s713]] %s712
        $region68: #{tpu_custom_call.1} parent=35 // pred_fallthru
          _
        // Predicated region
        $region69: #{tpu_custom_call.1} parent=35 // pred_check
          %p715 = pneg %p162
        $region70: #{tpu_custom_call.1} parent=35 // pred_check_branch
          %717 = sbr.rel (%p715) target = $region72
        $region71: #{tpu_custom_call.1} parent=35 // pred_region
          %719 = vsyncadd [#allocation14], 0
          %s721 = sshll.u32 %s4, 4
          %s722 = int_to_ptr.hbm [resolvable:$true] %s721
          %724 = dma.smem_to_hbm [#allocation20], 16, %s722, [#allocation14]
        $region72: #{tpu_custom_call.1} parent=35 // pred_fallthru
          _
        // Predicated region
        $region73: #{tpu_custom_call.1} parent=35 // pred_check
          %p725 = pneg %p162
        $region74: #{tpu_custom_call.1} parent=35 // pred_check_branch
          %727 = sbr.rel (%p725) target = $region76
        $region75: #{tpu_custom_call.1} parent=35 // pred_region
          %729 = dma.done [#allocation14], 16
        $region76: #{tpu_custom_call.1} parent=35 // pred_fallthru
          _
        %730 = sfence
      $region36: #{tpu_custom_call.1} parent=5 // pred_fallthru
        _
      %p731 = scmp.le.s32.totalorder 2, %s20
      // Predicated region
      $region77: #{tpu_custom_call.1} parent=5 // pred_check
        %p732 = pneg %p731
      $region78: #{tpu_custom_call.1} parent=5 // pred_check_branch
        %734 = sbr.rel (%p732) target = $region80
      $region79: #{tpu_custom_call.1} parent=5 // pred_region
        %s735 = ssub.s32 %s20, 2
      $region80: #{tpu_custom_call.1} parent=5 // pred_fallthru
        _
    $region6: #{tpu_custom_call.1} parent=1 // loop_footer
      %s24 = sadd.s32 1, %s20
    $region7: #{tpu_custom_call.1} parent=1 // loop_footer_branch
      %19 = sbr.rel target = $region3
    $region8: #{tpu_custom_call.1} parent=1 // loop_exit
      _
    %736 = vsyncpa [#allocation13], 1
    %s737 = scalar_lea.sflag [#allocation13], 1
    %738 = vsyncpa %s737, 1
    %739 = vsyncpa [#allocation16], 1
    %s740 = scalar_lea.sflag [#allocation16], 1
    %741 = vsyncpa %s740, 1
    %742 = vsyncpa [#allocation19], 1
    %s743 = scalar_lea.sflag [#allocation19], 1
    %744 = vsyncpa %s743, 1
    %745 = vsyncpa [#allocation14], 1
    %s746 = scalar_lea.sflag [#allocation14], 1
    %747 = vsyncpa %s746, 1

</llo_original>
